<compile_context>
chip_gen: v7x
topology: tpu7x:2x2x1
jax: 0.10.0
libtpu: 0.0.40
codegen_flags: <defaults>
</compile_context>

<pallas_src>
import functools

import jax
import jax.numpy as jnp
import numpy as np
from jax.experimental import pallas as pl
from jax.experimental.pallas import tpu as pltpu


# ----------------------------- Pallas kernel --------------------------------
def user_encoder_kernel(his_ref, w1_ref, b1_ref, w2_ref, b2_ref,
                        wqkv_ref, watt_ref, batt_ref, qatt_ref,
                        out_ref, qkv_sc, y_sc, *, num_heads, head_dim):
    tb, hist, dp = his_ref.shape          # batch tile, history, padded docvec dim
    emb = num_heads * head_dim
    rows = tb * hist
    scale = 1.0 / float(np.sqrt(head_dim))

    # ---- NewsEncoder (docvec MLP): Dense+ReLU -> Dense+ReLU -----------------
    x = his_ref[...].reshape(rows, dp).astype(jnp.bfloat16)
    h1 = jnp.dot(x, w1_ref[...], preferred_element_type=jnp.float32) + b1_ref[...]
    h1 = jnp.maximum(h1, 0.0)
    e = jnp.dot(h1.astype(jnp.bfloat16), w2_ref[...],
                preferred_element_type=jnp.float32) + b2_ref[...]
    e = jnp.maximum(e, 0.0)                                       # (rows, E) f32

    # ---- Fused QKV projection: a single wide MXU push ----------------------
    qkv_sc[...] = jnp.dot(e.astype(jnp.bfloat16), wqkv_ref[...],
                          preferred_element_type=jnp.float32)     # (rows, 3E)

    # ---- Multi-head self attention over the history axis -------------------
    # Heads are read from / written to VMEM scratch at static offsets; no
    # value-level lane concatenation.
    for b in range(tb):                       # small static tile loop (not B)
        r0 = b * hist
        for n in range(num_heads):
            c0 = n * head_dim
            qh = qkv_sc[r0:r0 + hist, c0:c0 + head_dim].astype(jnp.bfloat16)
            kh = qkv_sc[r0:r0 + hist,
                        emb + c0:emb + c0 + head_dim].astype(jnp.bfloat16)
            vh = qkv_sc[r0:r0 + hist,
                        2 * emb + c0:2 * emb + c0 + head_dim].astype(jnp.bfloat16)
            s = jnp.dot(qh, kh.T, preferred_element_type=jnp.float32) * scale
            s = s - jnp.max(s, axis=-1, keepdims=True)
            p = jnp.exp(s)
            p = p * pl.reciprocal(jnp.sum(p, axis=-1, keepdims=True), approx=True)
            y_sc[r0:r0 + hist, c0:c0 + head_dim] = jnp.dot(
                p.astype(jnp.bfloat16), vh, preferred_element_type=jnp.float32)

    # ---- Soft (additive) attention pooling over the history ----------------
    watt = watt_ref[...]
    batt = batt_ref[...]
    qatt = qatt_ref[...]
    users = []
    for b in range(tb):
        r0 = b * hist
        yb = y_sc[r0:r0 + hist, :]                                # (H, E) f32
        att = jnp.tanh(jnp.dot(yb.astype(jnp.bfloat16), watt,
                               preferred_element_type=jnp.float32) + batt)
        score = jnp.sum(att * qatt, axis=-1, keepdims=True)       # (H, 1)
        score = score - jnp.max(score, axis=0, keepdims=True)
        w = jnp.exp(score)
        w = w * pl.reciprocal(jnp.sum(w, axis=0, keepdims=True), approx=True)
        users.append(jnp.sum(yb * w, axis=0, keepdims=True))      # (1, E)

    # Single bulk store of the whole (tb, E) output block.
    out_ref[...] = users[0] if tb == 1 else jnp.concatenate(users, axis=0)


# ------------------------------- wrapper -------------------------------------
def user_encoder_forward(his, params, *, num_heads, head_dim, tb=1):
    B, H, D = his.shape
    E = num_heads * head_dim

    # Zero-pad docvec dim to a sublane-friendly width (30 -> 32).
    Dp = int(np.ceil(D / 8)) * 8
    # Pad the batch so it divides evenly into TB-sized tiles.
    G = -(-B // tb)
    Bp = G * tb

    his_p = jnp.pad(his.astype(jnp.float32), ((0, Bp - B), (0, 0), (0, Dp - D)))
    his_t = his_p.reshape(G, tb, H, Dp)

    # Matmul weights in bf16 (accumulation is f32 in-kernel); biases stay f32.
    w1 = jnp.pad(params["w1"], ((0, Dp - D), (0, 0))).astype(jnp.bfloat16)
    w2 = params["w2"].astype(jnp.bfloat16)
    # Fused QKV projection weight: one (E, 3E) matmul instead of three.
    wqkv = jnp.concatenate([params["wq"], params["wk"], params["wv"]],
                           axis=1).astype(jnp.bfloat16)
    watt = params["watt"].astype(jnp.bfloat16)
    b1 = params["b1"].astype(jnp.float32)
    b2 = params["b2"].astype(jnp.float32)
    batt = params["batt"].astype(jnp.float32)
    qatt = params["qatt"].astype(jnp.float32)

    kernel = functools.partial(user_encoder_kernel,
                               num_heads=num_heads, head_dim=head_dim)

    def resident(shape):
        return pl.BlockSpec(shape, lambda i: (0,) * len(shape))

    out = pl.pallas_call(
        kernel,
        out_shape=jax.ShapeDtypeStruct((G, tb, E), jnp.float32),
        grid=(G,),
        in_specs=[
            pl.BlockSpec((None, tb, H, Dp), lambda i: (i, 0, 0, 0)),   # his tile
            resident(w1.shape), resident(b1.shape),
            resident(w2.shape), resident(b2.shape),
            resident(wqkv.shape),
            resident(watt.shape), resident(batt.shape), resident(qatt.shape),
        ],
        out_specs=pl.BlockSpec((None, tb, E), lambda i: (i, 0, 0)),
        scratch_shapes=[
            pltpu.VMEM((tb * H, 3 * E), jnp.float32),   # fused qkv
            pltpu.VMEM((tb * H, E), jnp.float32),       # attended history y
        ],
        compiler_params=pltpu.CompilerParams(
            dimension_semantics=("parallel",)),
        # TODO(synk): for production B/H, pick tb so tb*H >= 128 (fills v5e's
        # 128-row MXU) and budget the per-step VMEM against v7x's 64 MiB
        # (raise vmem_limit_bytes here if needed).
    )(his_t, w1, b1, w2, b2, wqkv, watt, batt, qatt)

    return out.reshape(Bp, E)[:B]


# ----------------------------- pure-JAX reference ----------------------------
def user_encoder_reference(his, params, *, num_heads, head_dim):
    B, H, D = his.shape
    E = num_heads * head_dim
    x = his.reshape(B * H, D)
    h1 = jax.nn.relu(x @ params["w1"] + params["b1"])
    e = jax.nn.relu(h1 @ params["w2"] + params["b2"])
    q = (e @ params["wq"]).reshape(B, H, num_heads, head_dim).transpose(0, 2, 1, 3)
    k = (e @ params["wk"]).reshape(B, H, num_heads, head_dim).transpose(0, 2, 1, 3)
    v = (e @ params["wv"]).reshape(B, H, num_heads, head_dim).transpose(0, 2, 1, 3)
    s = jnp.einsum("bnqd,bnkd->bnqk", q, k) / jnp.sqrt(jnp.float32(head_dim))
    p = jax.nn.softmax(s, axis=-1)
    y = jnp.einsum("bnqk,bnkd->bnqd", p, v).transpose(0, 2, 1, 3).reshape(B, H, E)
    att = jnp.tanh(y @ params["watt"] + params["batt"])
    score = jnp.sum(att * params["qatt"], axis=-1, keepdims=True)
    w = jax.nn.softmax(score, axis=1)
    return jnp.sum(y * w, axis=1)


# --------------------------------- main ---------------------------------------
if __name__ == "__main__":
    # Small deterministic config.
    B, H = 2, 8                 # batch, history_size
    DOCVEC = 30                 # title_size (docvec dim fed to the NewsEncoder)
    NE_HIDDEN = 32              # NewsEncoder hidden width
    NUM_HEADS, HEAD_DIM = 4, 8  # -> embedding_dim E = 32
    ATT_DIM = 16                # SoftAttention hidden dim
    E = NUM_HEADS * HEAD_DIM

    key = jax.random.PRNGKey(0)
    ks = jax.random.split(key, 12)
    scale = 0.1
    params = {
        "w1":   jax.random.normal(ks[0], (DOCVEC, NE_HIDDEN), jnp.float32) * scale,
        "b1":   jax.random.normal(ks[1], (1, NE_HIDDEN), jnp.float32) * scale,
        "w2":   jax.random.normal(ks[2], (NE_HIDDEN, E), jnp.float32) * scale,
        "b2":   jax.random.normal(ks[3], (1, E), jnp.float32) * scale,
        "wq":   jax.random.normal(ks[4], (E, E), jnp.float32) * scale,
        "wk":   jax.random.normal(ks[5], (E, E), jnp.float32) * scale,
        "wv":   jax.random.normal(ks[6], (E, E), jnp.float32) * scale,
        "watt": jax.random.normal(ks[7], (E, ATT_DIM), jnp.float32) * scale,
        "batt": jax.random.normal(ks[8], (1, ATT_DIM), jnp.float32) * scale,
        "qatt": jax.random.normal(ks[9], (1, ATT_DIM), jnp.float32) * scale,
    }

    his_input_title = jax.random.normal(ks[10], (B, H, DOCVEC), jnp.float32)

    # tb=1 -> grid of B steps; on v7x the "parallel" grid axis shards over the
    # two TensorCores, on v5e/v6e it is simply a pipelined loop.
    out = user_encoder_forward(his_input_title, params,
                               num_heads=NUM_HEADS, head_dim=HEAD_DIM, tb=1)
    out = jax.block_until_ready(out)

    ref = user_encoder_reference(his_input_title, params,
                                 num_heads=NUM_HEADS, head_dim=HEAD_DIM)
    ref = jax.block_until_ready(ref)

    assert out.shape == (B, E), out.shape
    np.testing.assert_allclose(np.asarray(out), np.asarray(ref), rtol=1e-2, atol=1e-2)

    print("KERNEL_OK")
</pallas_src>

<mosaic_0001>
module attributes {stable_mosaic.version = 11 : i64} {
  func.func @user_encoder_kernel(%arg0: i32, %arg1: memref<1x1x8x32xf32, #tpu.memory_space<vmem>>, %arg2: memref<32x32xbf16, #tpu.memory_space<vmem>>, %arg3: memref<1x32xf32, #tpu.memory_space<vmem>>, %arg4: memref<32x32xbf16, #tpu.memory_space<vmem>>, %arg5: memref<1x32xf32, #tpu.memory_space<vmem>>, %arg6: memref<32x96xbf16, #tpu.memory_space<vmem>>, %arg7: memref<32x16xbf16, #tpu.memory_space<vmem>>, %arg8: memref<1x16xf32, #tpu.memory_space<vmem>>, %arg9: memref<1x16xf32, #tpu.memory_space<vmem>>, %arg10: memref<1x1x32xf32, #tpu.memory_space<vmem>>, %arg11: memref<8x96xf32, #tpu.memory_space<vmem>>, %arg12: memref<8x32xf32, #tpu.memory_space<vmem>>) attributes {dimension_semantics = [#tpu.dimension_semantics<parallel>], iteration_bounds = array<i64: 2>, scalar_prefetch = 0 : i64, scratch_operands = 2 : i64, tpu.core_type = #tpu.core_type<tc>, window_params = [{transform_indices = @transform_0, window_bounds = array<i64: 1, 1, 8, 32>}, {pipeline_mode = #tpu.pipeline_mode<synchronous>, transform_indices = @transform_1, window_bounds = array<i64: 32, 32>}, {pipeline_mode = #tpu.pipeline_mode<synchronous>, transform_indices = @transform_2, window_bounds = array<i64: 1, 32>}, {pipeline_mode = #tpu.pipeline_mode<synchronous>, transform_indices = @transform_3, window_bounds = array<i64: 32, 32>}, {pipeline_mode = #tpu.pipeline_mode<synchronous>, transform_indices = @transform_4, window_bounds = array<i64: 1, 32>}, {pipeline_mode = #tpu.pipeline_mode<synchronous>, transform_indices = @transform_5, window_bounds = array<i64: 32, 96>}, {pipeline_mode = #tpu.pipeline_mode<synchronous>, transform_indices = @transform_6, window_bounds = array<i64: 32, 16>}, {pipeline_mode = #tpu.pipeline_mode<synchronous>, transform_indices = @transform_7, window_bounds = array<i64: 1, 16>}, {pipeline_mode = #tpu.pipeline_mode<synchronous>, transform_indices = @transform_8, window_bounds = array<i64: 1, 16>}, {transform_indices = @transform_9, window_bounds = array<i64: 1, 1, 32>}]} {
    %c0 = arith.constant 0 : index
    %c0_0 = arith.constant 0 : index
    %c0_1 = arith.constant 0 : index
    %c0_2 = arith.constant 0 : index
    %0 = vector.load %arg1[%c0, %c0_0, %c0_1, %c0_2] : memref<1x1x8x32xf32, #tpu.memory_space<vmem>>, vector<1x1x8x32xf32>
    %1 = vector.shape_cast %0 : vector<1x1x8x32xf32> to vector<1x8x32xf32>
    %2 = vector.shape_cast %1 : vector<1x8x32xf32> to vector<8x32xf32>
    %3 = arith.truncf %2 : vector<8x32xf32> to vector<8x32xbf16>
    %c0_3 = arith.constant 0 : index
    %c0_4 = arith.constant 0 : index
    %4 = vector.load %arg2[%c0_3, %c0_4] : memref<32x32xbf16, #tpu.memory_space<vmem>>, vector<32x32xbf16>
    %cst = arith.constant dense<0.000000e+00> : vector<8x32xf32>
    %5 = tpu.matmul %3, %4, %cst {dimension_numbers = #tpu.dot_dimension_numbers<[1], [0], [0], [1], [0, 0, 1, 1], [], []>} : vector<8x32xbf16>, vector<32x32xbf16>, vector<8x32xf32> -> vector<8x32xf32>
    %c0_5 = arith.constant 0 : index
    %c0_6 = arith.constant 0 : index
    %6 = vector.load %arg3[%c0_5, %c0_6] : memref<1x32xf32, #tpu.memory_space<vmem>>, vector<1x32xf32>
    %7 = vector.broadcast %6 : vector<1x32xf32> to vector<8x32xf32>
    %8 = arith.addf %5, %7 : vector<8x32xf32>
    %cst_7 = arith.constant 0.000000e+00 : f32
    %9 = vector.broadcast %cst_7 : f32 to vector<8x32xf32>
    %10 = arith.maximumf %8, %9 : vector<8x32xf32>
    %11 = arith.truncf %10 : vector<8x32xf32> to vector<8x32xbf16>
    %c0_8 = arith.constant 0 : index
    %c0_9 = arith.constant 0 : index
    %12 = vector.load %arg4[%c0_8, %c0_9] : memref<32x32xbf16, #tpu.memory_space<vmem>>, vector<32x32xbf16>
    %cst_10 = arith.constant dense<0.000000e+00> : vector<8x32xf32>
    %13 = tpu.matmul %11, %12, %cst_10 {dimension_numbers = #tpu.dot_dimension_numbers<[1], [0], [0], [1], [0, 0, 1, 1], [], []>} : vector<8x32xbf16>, vector<32x32xbf16>, vector<8x32xf32> -> vector<8x32xf32>
    %c0_11 = arith.constant 0 : index
    %c0_12 = arith.constant 0 : index
    %14 = vector.load %arg5[%c0_11, %c0_12] : memref<1x32xf32, #tpu.memory_space<vmem>>, vector<1x32xf32>
    %15 = vector.broadcast %14 : vector<1x32xf32> to vector<8x32xf32>
    %16 = arith.addf %13, %15 : vector<8x32xf32>
    %cst_13 = arith.constant 0.000000e+00 : f32
    %17 = vector.broadcast %cst_13 : f32 to vector<8x32xf32>
    %18 = arith.maximumf %16, %17 : vector<8x32xf32>
    %19 = arith.truncf %18 : vector<8x32xf32> to vector<8x32xbf16>
    %c0_14 = arith.constant 0 : index
    %c0_15 = arith.constant 0 : index
    %20 = vector.load %arg6[%c0_14, %c0_15] : memref<32x96xbf16, #tpu.memory_space<vmem>>, vector<32x96xbf16>
    %cst_16 = arith.constant dense<0.000000e+00> : vector<8x96xf32>
    %21 = tpu.matmul %19, %20, %cst_16 {dimension_numbers = #tpu.dot_dimension_numbers<[1], [0], [0], [1], [0, 0, 1, 1], [], []>} : vector<8x32xbf16>, vector<32x96xbf16>, vector<8x96xf32> -> vector<8x96xf32>
    %c0_17 = arith.constant 0 : index
    %c0_18 = arith.constant 0 : index
    %22 = vector.load %arg11[%c0_17, %c0_18] : memref<8x96xf32, #tpu.memory_space<vmem>>, vector<8x96xf32>
    tpu.vector_store %arg11[%c0_17, %c0_18], %21 {strides = array<i32>} : memref<8x96xf32, #tpu.memory_space<vmem>>, vector<8x96xf32>,
    %c0_19 = arith.constant 0 : index
    %c0_20 = arith.constant 0 : index
    %23 = vector.load %arg11[%c0_19, %c0_20] : memref<8x96xf32, #tpu.memory_space<vmem>>, vector<8x8xf32>
    %24 = arith.truncf %23 : vector<8x8xf32> to vector<8x8xbf16>
    %c0_21 = arith.constant 0 : index
    %c32 = arith.constant 32 : index
    %25 = vector.load %arg11[%c0_21, %c32] : memref<8x96xf32, #tpu.memory_space<vmem>>, vector<8x8xf32>
    %26 = arith.truncf %25 : vector<8x8xf32> to vector<8x8xbf16>
    %c0_22 = arith.constant 0 : index
    %c64 = arith.constant 64 : index
    %27 = vector.load %arg11[%c0_22, %c64] : memref<8x96xf32, #tpu.memory_space<vmem>>, vector<8x8xf32>
    %28 = arith.truncf %27 : vector<8x8xf32> to vector<8x8xbf16>
    %29 = tpu.transpose %26, [1, 0] : vector<8x8xbf16> -> vector<8x8xbf16>
    %cst_23 = arith.constant dense<0.000000e+00> : vector<8x8xf32>
    %30 = tpu.matmul %24, %29, %cst_23 {dimension_numbers = #tpu.dot_dimension_numbers<[1], [0], [0], [1], [0, 0, 1, 1], [], []>} : vector<8x8xbf16>, vector<8x8xbf16>, vector<8x8xf32> -> vector<8x8xf32>
    %cst_24 = arith.constant 0.353553385 : f32
    %31 = vector.broadcast %cst_24 : f32 to vector<8x8xf32>
    %32 = arith.mulf %30, %31 : vector<8x8xf32>
    %cst_25 = arith.constant dense<0xFF800000> : vector<8xf32>
    %33 = vector.multi_reduction <maximumf>, %32, %cst_25 [1] : vector<8x8xf32> to vector<8xf32>
    %34 = vector.shape_cast %33 : vector<8xf32> to vector<8x1xf32>
    %35 = vector.broadcast %34 : vector<8x1xf32> to vector<8x8xf32>
    %36 = arith.subf %32, %35 : vector<8x8xf32>
    %37 = math.exp %36 : vector<8x8xf32>
    %cst_26 = arith.constant dense<0.000000e+00> : vector<8xf32>
    %38 = vector.multi_reduction <add>, %37, %cst_26 [1] : vector<8x8xf32> to vector<8xf32>
    %39 = vector.shape_cast %38 : vector<8xf32> to vector<8x1xf32>
    %40 = tpu.reciprocal %39 {approx = true} : vector<8x1xf32> -> vector<8x1xf32>
    %41 = vector.broadcast %40 : vector<8x1xf32> to vector<8x8xf32>
    %42 = arith.mulf %37, %41 : vector<8x8xf32>
    %43 = arith.truncf %42 : vector<8x8xf32> to vector<8x8xbf16>
    %cst_27 = arith.constant dense<0.000000e+00> : vector<8x8xf32>
    %44 = tpu.matmul %43, %28, %cst_27 {dimension_numbers = #tpu.dot_dimension_numbers<[1], [0], [0], [1], [0, 0, 1, 1], [], []>} : vector<8x8xbf16>, vector<8x8xbf16>, vector<8x8xf32> -> vector<8x8xf32>
    %c0_28 = arith.constant 0 : index
    %c0_29 = arith.constant 0 : index
    %45 = vector.load %arg12[%c0_28, %c0_29] : memref<8x32xf32, #tpu.memory_space<vmem>>, vector<8x8xf32>
    tpu.vector_store %arg12[%c0_28, %c0_29], %44 {strides = array<i32>} : memref<8x32xf32, #tpu.memory_space<vmem>>, vector<8x8xf32>,
    %c0_30 = arith.constant 0 : index
    %c8 = arith.constant 8 : index
    %46 = vector.load %arg11[%c0_30, %c8] : memref<8x96xf32, #tpu.memory_space<vmem>>, vector<8x8xf32>
    %47 = arith.truncf %46 : vector<8x8xf32> to vector<8x8xbf16>
    %c0_31 = arith.constant 0 : index
    %c40 = arith.constant 40 : index
    %48 = vector.load %arg11[%c0_31, %c40] : memref<8x96xf32, #tpu.memory_space<vmem>>, vector<8x8xf32>
    %49 = arith.truncf %48 : vector<8x8xf32> to vector<8x8xbf16>
    %c0_32 = arith.constant 0 : index
    %c72 = arith.constant 72 : index
    %50 = vector.load %arg11[%c0_32, %c72] : memref<8x96xf32, #tpu.memory_space<vmem>>, vector<8x8xf32>
    %51 = arith.truncf %50 : vector<8x8xf32> to vector<8x8xbf16>
    %52 = tpu.transpose %49, [1, 0] : vector<8x8xbf16> -> vector<8x8xbf16>
    %cst_33 = arith.constant dense<0.000000e+00> : vector<8x8xf32>
    %53 = tpu.matmul %47, %52, %cst_33 {dimension_numbers = #tpu.dot_dimension_numbers<[1], [0], [0], [1], [0, 0, 1, 1], [], []>} : vector<8x8xbf16>, vector<8x8xbf16>, vector<8x8xf32> -> vector<8x8xf32>
    %cst_34 = arith.constant 0.353553385 : f32
    %54 = vector.broadcast %cst_34 : f32 to vector<8x8xf32>
    %55 = arith.mulf %53, %54 : vector<8x8xf32>
    %cst_35 = arith.constant dense<0xFF800000> : vector<8xf32>
    %56 = vector.multi_reduction <maximumf>, %55, %cst_35 [1] : vector<8x8xf32> to vector<8xf32>
    %57 = vector.shape_cast %56 : vector<8xf32> to vector<8x1xf32>
    %58 = vector.broadcast %57 : vector<8x1xf32> to vector<8x8xf32>
    %59 = arith.subf %55, %58 : vector<8x8xf32>
    %60 = math.exp %59 : vector<8x8xf32>
    %cst_36 = arith.constant dense<0.000000e+00> : vector<8xf32>
    %61 = vector.multi_reduction <add>, %60, %cst_36 [1] : vector<8x8xf32> to vector<8xf32>
    %62 = vector.shape_cast %61 : vector<8xf32> to vector<8x1xf32>
    %63 = tpu.reciprocal %62 {approx = true} : vector<8x1xf32> -> vector<8x1xf32>
    %64 = vector.broadcast %63 : vector<8x1xf32> to vector<8x8xf32>
    %65 = arith.mulf %60, %64 : vector<8x8xf32>
    %66 = arith.truncf %65 : vector<8x8xf32> to vector<8x8xbf16>
    %cst_37 = arith.constant dense<0.000000e+00> : vector<8x8xf32>
    %67 = tpu.matmul %66, %51, %cst_37 {dimension_numbers = #tpu.dot_dimension_numbers<[1], [0], [0], [1], [0, 0, 1, 1], [], []>} : vector<8x8xbf16>, vector<8x8xbf16>, vector<8x8xf32> -> vector<8x8xf32>
    %c0_38 = arith.constant 0 : index
    %c8_39 = arith.constant 8 : index
    %68 = vector.load %arg12[%c0_38, %c8_39] : memref<8x32xf32, #tpu.memory_space<vmem>>, vector<8x8xf32>
    tpu.vector_store %arg12[%c0_38, %c8_39], %67 {strides = array<i32>} : memref<8x32xf32, #tpu.memory_space<vmem>>, vector<8x8xf32>,
    %c0_40 = arith.constant 0 : index
    %c16 = arith.constant 16 : index
    %69 = vector.load %arg11[%c0_40, %c16] : memref<8x96xf32, #tpu.memory_space<vmem>>, vector<8x8xf32>
    %70 = arith.truncf %69 : vector<8x8xf32> to vector<8x8xbf16>
    %c0_41 = arith.constant 0 : index
    %c48 = arith.constant 48 : index
    %71 = vector.load %arg11[%c0_41, %c48] : memref<8x96xf32, #tpu.memory_space<vmem>>, vector<8x8xf32>
    %72 = arith.truncf %71 : vector<8x8xf32> to vector<8x8xbf16>
    %c0_42 = arith.constant 0 : index
    %c80 = arith.constant 80 : index
    %73 = vector.load %arg11[%c0_42, %c80] : memref<8x96xf32, #tpu.memory_space<vmem>>, vector<8x8xf32>
    %74 = arith.truncf %73 : vector<8x8xf32> to vector<8x8xbf16>
    %75 = tpu.transpose %72, [1, 0] : vector<8x8xbf16> -> vector<8x8xbf16>
    %cst_43 = arith.constant dense<0.000000e+00> : vector<8x8xf32>
    %76 = tpu.matmul %70, %75, %cst_43 {dimension_numbers = #tpu.dot_dimension_numbers<[1], [0], [0], [1], [0, 0, 1, 1], [], []>} : vector<8x8xbf16>, vector<8x8xbf16>, vector<8x8xf32> -> vector<8x8xf32>
    %cst_44 = arith.constant 0.353553385 : f32
    %77 = vector.broadcast %cst_44 : f32 to vector<8x8xf32>
    %78 = arith.mulf %76, %77 : vector<8x8xf32>
    %cst_45 = arith.constant dense<0xFF800000> : vector<8xf32>
    %79 = vector.multi_reduction <maximumf>, %78, %cst_45 [1] : vector<8x8xf32> to vector<8xf32>
    %80 = vector.shape_cast %79 : vector<8xf32> to vector<8x1xf32>
    %81 = vector.broadcast %80 : vector<8x1xf32> to vector<8x8xf32>
    %82 = arith.subf %78, %81 : vector<8x8xf32>
    %83 = math.exp %82 : vector<8x8xf32>
    %cst_46 = arith.constant dense<0.000000e+00> : vector<8xf32>
    %84 = vector.multi_reduction <add>, %83, %cst_46 [1] : vector<8x8xf32> to vector<8xf32>
    %85 = vector.shape_cast %84 : vector<8xf32> to vector<8x1xf32>
    %86 = tpu.reciprocal %85 {approx = true} : vector<8x1xf32> -> vector<8x1xf32>
    %87 = vector.broadcast %86 : vector<8x1xf32> to vector<8x8xf32>
    %88 = arith.mulf %83, %87 : vector<8x8xf32>
    %89 = arith.truncf %88 : vector<8x8xf32> to vector<8x8xbf16>
    %cst_47 = arith.constant dense<0.000000e+00> : vector<8x8xf32>
    %90 = tpu.matmul %89, %74, %cst_47 {dimension_numbers = #tpu.dot_dimension_numbers<[1], [0], [0], [1], [0, 0, 1, 1], [], []>} : vector<8x8xbf16>, vector<8x8xbf16>, vector<8x8xf32> -> vector<8x8xf32>
    %c0_48 = arith.constant 0 : index
    %c16_49 = arith.constant 16 : index
    %91 = vector.load %arg12[%c0_48, %c16_49] : memref<8x32xf32, #tpu.memory_space<vmem>>, vector<8x8xf32>
    tpu.vector_store %arg12[%c0_48, %c16_49], %90 {strides = array<i32>} : memref<8x32xf32, #tpu.memory_space<vmem>>, vector<8x8xf32>,
    %c0_50 = arith.constant 0 : index
    %c24 = arith.constant 24 : index
    %92 = vector.load %arg11[%c0_50, %c24] : memref<8x96xf32, #tpu.memory_space<vmem>>, vector<8x8xf32>
    %93 = arith.truncf %92 : vector<8x8xf32> to vector<8x8xbf16>
    %c0_51 = arith.constant 0 : index
    %c56 = arith.constant 56 : index
    %94 = vector.load %arg11[%c0_51, %c56] : memref<8x96xf32, #tpu.memory_space<vmem>>, vector<8x8xf32>
    %95 = arith.truncf %94 : vector<8x8xf32> to vector<8x8xbf16>
    %c0_52 = arith.constant 0 : index
    %c88 = arith.constant 88 : index
    %96 = vector.load %arg11[%c0_52, %c88] : memref<8x96xf32, #tpu.memory_space<vmem>>, vector<8x8xf32>
    %97 = arith.truncf %96 : vector<8x8xf32> to vector<8x8xbf16>
    %98 = tpu.transpose %95, [1, 0] : vector<8x8xbf16> -> vector<8x8xbf16>
    %cst_53 = arith.constant dense<0.000000e+00> : vector<8x8xf32>
    %99 = tpu.matmul %93, %98, %cst_53 {dimension_numbers = #tpu.dot_dimension_numbers<[1], [0], [0], [1], [0, 0, 1, 1], [], []>} : vector<8x8xbf16>, vector<8x8xbf16>, vector<8x8xf32> -> vector<8x8xf32>
    %cst_54 = arith.constant 0.353553385 : f32
    %100 = vector.broadcast %cst_54 : f32 to vector<8x8xf32>
    %101 = arith.mulf %99, %100 : vector<8x8xf32>
    %cst_55 = arith.constant dense<0xFF800000> : vector<8xf32>
    %102 = vector.multi_reduction <maximumf>, %101, %cst_55 [1] : vector<8x8xf32> to vector<8xf32>
    %103 = vector.shape_cast %102 : vector<8xf32> to vector<8x1xf32>
    %104 = vector.broadcast %103 : vector<8x1xf32> to vector<8x8xf32>
    %105 = arith.subf %101, %104 : vector<8x8xf32>
    %106 = math.exp %105 : vector<8x8xf32>
    %cst_56 = arith.constant dense<0.000000e+00> : vector<8xf32>
    %107 = vector.multi_reduction <add>, %106, %cst_56 [1] : vector<8x8xf32> to vector<8xf32>
    %108 = vector.shape_cast %107 : vector<8xf32> to vector<8x1xf32>
    %109 = tpu.reciprocal %108 {approx = true} : vector<8x1xf32> -> vector<8x1xf32>
    %110 = vector.broadcast %109 : vector<8x1xf32> to vector<8x8xf32>
    %111 = arith.mulf %106, %110 : vector<8x8xf32>
    %112 = arith.truncf %111 : vector<8x8xf32> to vector<8x8xbf16>
    %cst_57 = arith.constant dense<0.000000e+00> : vector<8x8xf32>
    %113 = tpu.matmul %112, %97, %cst_57 {dimension_numbers = #tpu.dot_dimension_numbers<[1], [0], [0], [1], [0, 0, 1, 1], [], []>} : vector<8x8xbf16>, vector<8x8xbf16>, vector<8x8xf32> -> vector<8x8xf32>
    %c0_58 = arith.constant 0 : index
    %c24_59 = arith.constant 24 : index
    %114 = vector.load %arg12[%c0_58, %c24_59] : memref<8x32xf32, #tpu.memory_space<vmem>>, vector<8x8xf32>
    tpu.vector_store %arg12[%c0_58, %c24_59], %113 {strides = array<i32>} : memref<8x32xf32, #tpu.memory_space<vmem>>, vector<8x8xf32>,
    %c0_60 = arith.constant 0 : index
    %c0_61 = arith.constant 0 : index
    %115 = vector.load %arg7[%c0_60, %c0_61] : memref<32x16xbf16, #tpu.memory_space<vmem>>, vector<32x16xbf16>
    %c0_62 = arith.constant 0 : index
    %c0_63 = arith.constant 0 : index
    %116 = vector.load %arg8[%c0_62, %c0_63] : memref<1x16xf32, #tpu.memory_space<vmem>>, vector<1x16xf32>
    %c0_64 = arith.constant 0 : index
    %c0_65 = arith.constant 0 : index
    %117 = vector.load %arg9[%c0_64, %c0_65] : memref<1x16xf32, #tpu.memory_space<vmem>>, vector<1x16xf32>
    %c0_66 = arith.constant 0 : index
    %c0_67 = arith.constant 0 : index
    %118 = vector.load %arg12[%c0_66, %c0_67] : memref<8x32xf32, #tpu.memory_space<vmem>>, vector<8x32xf32>
    %119 = arith.truncf %118 : vector<8x32xf32> to vector<8x32xbf16>
    %cst_68 = arith.constant dense<0.000000e+00> : vector<8x16xf32>
    %120 = tpu.matmul %119, %115, %cst_68 {dimension_numbers = #tpu.dot_dimension_numbers<[1], [0], [0], [1], [0, 0, 1, 1], [], []>} : vector<8x32xbf16>, vector<32x16xbf16>, vector<8x16xf32> -> vector<8x16xf32>
    %121 = vector.broadcast %116 : vector<1x16xf32> to vector<8x16xf32>
    %122 = arith.addf %120, %121 : vector<8x16xf32>
    %123 = math.tanh %122 : vector<8x16xf32>
    %124 = vector.broadcast %117 : vector<1x16xf32> to vector<8x16xf32>
    %125 = arith.mulf %123, %124 : vector<8x16xf32>
    %cst_69 = arith.constant dense<0.000000e+00> : vector<8xf32>
    %126 = vector.multi_reduction <add>, %125, %cst_69 [1] : vector<8x16xf32> to vector<8xf32>
    %127 = vector.shape_cast %126 : vector<8xf32> to vector<8x1xf32>
    %cst_70 = arith.constant dense<0xFF800000> : vector<1xf32>
    %128 = vector.multi_reduction <maximumf>, %127, %cst_70 [0] : vector<8x1xf32> to vector<1xf32>
    %129 = vector.shape_cast %128 : vector<1xf32> to vector<1x1xf32>
    %130 = vector.broadcast %129 : vector<1x1xf32> to vector<8x1xf32>
    %131 = arith.subf %127, %130 : vector<8x1xf32>
    %132 = math.exp %131 : vector<8x1xf32>
    %cst_71 = arith.constant dense<0.000000e+00> : vector<1xf32>
    %133 = vector.multi_reduction <add>, %132, %cst_71 [0] : vector<8x1xf32> to vector<1xf32>
    %134 = vector.shape_cast %133 : vector<1xf32> to vector<1x1xf32>
    %135 = tpu.reciprocal %134 {approx = true} : vector<1x1xf32> -> vector<1x1xf32>
    %136 = vector.broadcast %135 : vector<1x1xf32> to vector<8x1xf32>
    %137 = arith.mulf %132, %136 : vector<8x1xf32>
    %138 = vector.broadcast %137 : vector<8x1xf32> to vector<8x32xf32>
    %139 = arith.mulf %118, %138 : vector<8x32xf32>
    %cst_72 = arith.constant dense<0.000000e+00> : vector<32xf32>
    %140 = vector.multi_reduction <add>, %139, %cst_72 [0] : vector<8x32xf32> to vector<32xf32>
    %141 = vector.shape_cast %140 : vector<32xf32> to vector<1x32xf32>
    %c0_73 = arith.constant 0 : index
    %c0_74 = arith.constant 0 : index
    %c0_75 = arith.constant 0 : index
    %142 = vector.load %arg10[%c0_73, %c0_74, %c0_75] : memref<1x1x32xf32, #tpu.memory_space<vmem>>, vector<1x1x32xf32>
    %143 = vector.shape_cast %142 : vector<1x1x32xf32> to vector<1x32xf32>
    %144 = vector.shape_cast %141 : vector<1x32xf32> to vector<1x1x32xf32>
    tpu.vector_store %arg10[%c0_73, %c0_74, %c0_75], %144 {strides = array<i32>} : memref<1x1x32xf32, #tpu.memory_space<vmem>>, vector<1x1x32xf32>,
    return
  }
  func.func @transform_0(%arg0: i32) -> (i32, i32, i32, i32) {
    %c0_i32 = arith.constant 0 : i32
    %c0_i32_0 = arith.constant 0 : i32
    %c0_i32_1 = arith.constant 0 : i32
    %c0_i32_2 = arith.constant 0 : i32
    return %arg0, %c0_i32, %c0_i32_0, %c0_i32_1 : i32, i32, i32, i32
  }
  func.func @transform_1(%arg0: i32) -> (i32, i32) {
    %c0_i32 = arith.constant 0 : i32
    %c0_i32_0 = arith.constant 0 : i32
    %c0_i32_1 = arith.constant 0 : i32
    return %c0_i32, %c0_i32_0 : i32, i32
  }
  func.func @transform_2(%arg0: i32) -> (i32, i32) {
    %c0_i32 = arith.constant 0 : i32
    %c0_i32_0 = arith.constant 0 : i32
    %c0_i32_1 = arith.constant 0 : i32
    return %c0_i32, %c0_i32_0 : i32, i32
  }
  func.func @transform_3(%arg0: i32) -> (i32, i32) {
    %c0_i32 = arith.constant 0 : i32
    %c0_i32_0 = arith.constant 0 : i32
    %c0_i32_1 = arith.constant 0 : i32
    return %c0_i32, %c0_i32_0 : i32, i32
  }
  func.func @transform_4(%arg0: i32) -> (i32, i32) {
    %c0_i32 = arith.constant 0 : i32
    %c0_i32_0 = arith.constant 0 : i32
    %c0_i32_1 = arith.constant 0 : i32
    return %c0_i32, %c0_i32_0 : i32, i32
  }
  func.func @transform_5(%arg0: i32) -> (i32, i32) {
    %c0_i32 = arith.constant 0 : i32
    %c0_i32_0 = arith.constant 0 : i32
    %c0_i32_1 = arith.constant 0 : i32
    return %c0_i32, %c0_i32_0 : i32, i32
  }
  func.func @transform_6(%arg0: i32) -> (i32, i32) {
    %c0_i32 = arith.constant 0 : i32
    %c0_i32_0 = arith.constant 0 : i32
    %c0_i32_1 = arith.constant 0 : i32
    return %c0_i32, %c0_i32_0 : i32, i32
  }
  func.func @transform_7(%arg0: i32) -> (i32, i32) {
    %c0_i32 = arith.constant 0 : i32
    %c0_i32_0 = arith.constant 0 : i32
    %c0_i32_1 = arith.constant 0 : i32
    return %c0_i32, %c0_i32_0 : i32, i32
  }
  func.func @transform_8(%arg0: i32) -> (i32, i32) {
    %c0_i32 = arith.constant 0 : i32
    %c0_i32_0 = arith.constant 0 : i32
    %c0_i32_1 = arith.constant 0 : i32
    return %c0_i32, %c0_i32_0 : i32, i32
  }
  func.func @transform_9(%arg0: i32) -> (i32, i32, i32) {
    %c0_i32 = arith.constant 0 : i32
    %c0_i32_0 = arith.constant 0 : i32
    %c0_i32_1 = arith.constant 0 : i32
    return %arg0, %c0_i32, %c0_i32_0 : i32, i32, i32
  }
}

</mosaic_0001>

<llo_original>
// kernel: tpu_custom_call.1
$region0: #{tpu_custom_call.1}
  #allocation0 [shape = 'u32[]', space=smem, size = 0x4, offset = 0x4, fixed_abs, tag = 'smem constant byte address 0x4 - core index']
  #allocation1 [shape = 'u32[144,128]{1,0:T(1,128)}', space=vmem, size = 0x12000, scoped, tag = 'internal scratch']
  #allocation2 [shape = 'f32[8,96]{1,0:T(8,128)}', space=vmem, size = 0x1000, scoped, tag = 'scratch operand']
  #allocation3 [shape = 'f32[8,32]{1,0:T(8,128)}', space=vmem, size = 0x1000, scoped, tag = 'scratch operand']
  %s0 = inlined_call_operand.vmem [shape: f32[2,1,8,32], index: 0, kind: input, shape index: {}]
  %s1 = inlined_call_operand.hbm [shape: bf16[32,32], index: 1, kind: input, shape index: {}]
  %s2 = inlined_call_operand.vmem [shape: f32[1,32], index: 2, kind: input, shape index: {}]
  %s3 = inlined_call_operand.vmem [shape: bf16[32,32], index: 3, kind: input, shape index: {}]
  %s4 = inlined_call_operand.vmem [shape: f32[1,32], index: 4, kind: input, shape index: {}]
  %s5 = inlined_call_operand.hbm [shape: bf16[32,96], index: 5, kind: input, shape index: {}]
  %s6 = inlined_call_operand.vmem [shape: bf16[32,16], index: 6, kind: input, shape index: {}]
  %s7 = inlined_call_operand.vmem [shape: f32[1,16], index: 7, kind: input, shape index: {}]
  %s8 = inlined_call_operand.vmem [shape: f32[1,16], index: 8, kind: input, shape index: {}]
  %s9 = inlined_call_operand.hbm [shape: f32[2,1,32], index: 9, kind: output, shape index: {}]
  %s10 = sld [smem:[#allocation0]]
  $region77: #{tpu_custom_call.1} parent=0
    _
  %s12 = ssub.s32 1, %s10
  %s13 = scalar_select 0, %s12, %s10
  $region1: #{tpu_custom_call.1} parent=0
    #allocation4 [shape = 'u8[8192]{0}', space=vmem, size = 0x2000, scoped, tag = 'input window, operand 1, single buffered']
    #allocation5 [shape = 's32[2]{0}', space=sflag, size = 0x8, scoped, tag = 'scoped memory for tpu_custom_call.1']
    #allocation6 [shape = 's32[2]{0}', space=sflag, size = 0x8, scoped, tag = 'scoped memory for tpu_custom_call.1']
    #allocation7 [shape = 'u8[8192]{0}', space=vmem, size = 0x2000, scoped, tag = 'input window, operand 5, single buffered']
    #allocation8 [shape = 's32[1]{0}', space=sflag, size = 0x4, scoped, tag = 'scoped memory for tpu_custom_call.1']
    #allocation9 [shape = 'u8[1024]{0}', space=vmem, size = 0x400, scoped, tag = 'output window, operand 0']
    %14 = vsyncpa [#allocation5], 0
    %15 = vsyncpa [#allocation8], 0
    %16 = vsyncpa [#allocation6], 0
    %s17 = scalar_lea.sflag [#allocation6], 1
    %18 = vsyncpa %s17, 0
    loop: start=0, step=1, limit=4
    $region2: #{tpu_custom_call.1} parent=1 // loop_pre_header
      _
    $region3: #{tpu_custom_call.1} parent=1 // loop_header
      %s20 = sphi 0, %s24
      %p21 = scmp.ge.s32.totalorder %s20, 4
      %s30 = sphi 0, %s32
      %s33 = sphi 0, %s30
      %s34 = sphi 0, %s33
      %s50 = sphi 0, %s34
      %s54 = sphi 0, %s54
      %s56 = sphi 0, %s54
      %s57 = sphi 0, %s56
      %s71 = sphi 0, %s57
      %s75 = sphi 0, %s75
      %s77 = sphi 0, %s75
      %s78 = sphi 0, %s77
      %s92 = sphi 0, %s78
      %s96 = sphi 0, %s96
      %s98 = sphi 0, %s96
      %s99 = sphi 0, %s98
      %s113 = sphi 0, %s99
      %s117 = sphi 0, %s117
      %s119 = sphi 0, %s117
      %s120 = sphi 0, %s119
      %s134 = sphi 0, %s120
      %s138 = sphi 0, %s138
      %s140 = sphi 0, %s138
      %s141 = sphi 0, %s140
      %s155 = sphi 0, %s141
      %s159 = sphi 0, %s159
      %s161 = sphi 0, %s159
      %s162 = sphi 0, %s161
      %s176 = sphi 0, %s162
      %s180 = sphi 0, %s180
      %s182 = sphi 0, %s180
      %s183 = sphi 0, %s182
      %s197 = sphi 0, %s183
      %s201 = sphi 0, %s201
      %s203 = sphi 0, %s201
      %s204 = sphi 0, %s203
      %s218 = sphi 0, %s204
      %s224 = sphi 0, %s226
      %s227 = sphi 0, %s224
      %s228 = sphi 0, %s227
      %s244 = sphi 0, %s228
    $region4: #{tpu_custom_call.1} parent=1 // loop_header_branch
      %23 = sbr.rel (%p21) target = $region8
    $region5: #{tpu_custom_call.1} parent=1 // loop_body
      %s25 = ssub.s32 %s20, 1
      %s26 = ssub.s32 %s20, 2
      %s27 = sadd.s32 %s20, 1
      %s28 = ssub.s32 %s20, %s27
      %p29 = scmp.eq.s32.totalorder %s28, 0
      %s31 = sadd.s32 %s30, 1
      %s32 = scalar_select %p29, %s30, %s31
      %p35 = pneg %p29
      %p36 = scmp.eq.s32.totalorder %s20, 1
      %p37 = por %p35, %p36
      %p38 = scmp.ne.s32.totalorder %s30, %s33
      %p39 = scmp.eq.s32.totalorder %s20, 0
      %p40 = por %p38, %p39
      %p41 = scmp.ne.s32.totalorder %s30, %s33
      %p42 = scmp.eq.s32.totalorder %s25, 1
      %p43 = por %p41, %p42
      %p44 = scmp.ne.s32.totalorder %s33, %s34
      %p45 = scmp.eq.s32.totalorder %s25, 0
      %p46 = por %p44, %p45
      %p47 = scmp.ne.s32.totalorder %s33, %s34
      %p48 = scmp.eq.s32.totalorder %s26, 1
      %p49 = por %p47, %p48
      %p51 = scmp.ne.s32.totalorder %s34, %s50
      %p52 = scmp.eq.s32.totalorder %s26, 0
      %p53 = por %p51, %p52
      %s55 = sadd.s32 %s54, 1
      %p58 = scmp.eq.s32.totalorder %s20, 1
      %p59 = scmp.ne.s32.totalorder %s54, %s56
      %p60 = scmp.eq.s32.totalorder %s20, 0
      %p61 = por %p59, %p60
      %p62 = scmp.ne.s32.totalorder %s54, %s56
      %p63 = scmp.eq.s32.totalorder %s25, 1
      %p64 = por %p62, %p63
      %p65 = scmp.ne.s32.totalorder %s56, %s57
      %p66 = scmp.eq.s32.totalorder %s25, 0
      %p67 = por %p65, %p66
      %p68 = scmp.ne.s32.totalorder %s56, %s57
      %p69 = scmp.eq.s32.totalorder %s26, 1
      %p70 = por %p68, %p69
      %p72 = scmp.ne.s32.totalorder %s57, %s71
      %p73 = scmp.eq.s32.totalorder %s26, 0
      %p74 = por %p72, %p73
      %s76 = sadd.s32 %s75, 1
      %p79 = scmp.eq.s32.totalorder %s20, 1
      %p80 = scmp.ne.s32.totalorder %s75, %s77
      %p81 = scmp.eq.s32.totalorder %s20, 0
      %p82 = por %p80, %p81
      %p83 = scmp.ne.s32.totalorder %s75, %s77
      %p84 = scmp.eq.s32.totalorder %s25, 1
      %p85 = por %p83, %p84
      %p86 = scmp.ne.s32.totalorder %s77, %s78
      %p87 = scmp.eq.s32.totalorder %s25, 0
      %p88 = por %p86, %p87
      %p89 = scmp.ne.s32.totalorder %s77, %s78
      %p90 = scmp.eq.s32.totalorder %s26, 1
      %p91 = por %p89, %p90
      %p93 = scmp.ne.s32.totalorder %s78, %s92
      %p94 = scmp.eq.s32.totalorder %s26, 0
      %p95 = por %p93, %p94
      %s97 = sadd.s32 %s96, 1
      %p100 = scmp.eq.s32.totalorder %s20, 1
      %p101 = scmp.ne.s32.totalorder %s96, %s98
      %p102 = scmp.eq.s32.totalorder %s20, 0
      %p103 = por %p101, %p102
      %p104 = scmp.ne.s32.totalorder %s96, %s98
      %p105 = scmp.eq.s32.totalorder %s25, 1
      %p106 = por %p104, %p105
      %p107 = scmp.ne.s32.totalorder %s98, %s99
      %p108 = scmp.eq.s32.totalorder %s25, 0
      %p109 = por %p107, %p108
      %p110 = scmp.ne.s32.totalorder %s98, %s99
      %p111 = scmp.eq.s32.totalorder %s26, 1
      %p112 = por %p110, %p111
      %p114 = scmp.ne.s32.totalorder %s99, %s113
      %p115 = scmp.eq.s32.totalorder %s26, 0
      %p116 = por %p114, %p115
      %s118 = sadd.s32 %s117, 1
      %p121 = scmp.eq.s32.totalorder %s20, 1
      %p122 = scmp.ne.s32.totalorder %s117, %s119
      %p123 = scmp.eq.s32.totalorder %s20, 0
      %p124 = por %p122, %p123
      %p125 = scmp.ne.s32.totalorder %s117, %s119
      %p126 = scmp.eq.s32.totalorder %s25, 1
      %p127 = por %p125, %p126
      %p128 = scmp.ne.s32.totalorder %s119, %s120
      %p129 = scmp.eq.s32.totalorder %s25, 0
      %p130 = por %p128, %p129
      %p131 = scmp.ne.s32.totalorder %s119, %s120
      %p132 = scmp.eq.s32.totalorder %s26, 1
      %p133 = por %p131, %p132
      %p135 = scmp.ne.s32.totalorder %s120, %s134
      %p136 = scmp.eq.s32.totalorder %s26, 0
      %p137 = por %p135, %p136
      %s139 = sadd.s32 %s138, 1
      %p142 = scmp.eq.s32.totalorder %s20, 1
      %p143 = scmp.ne.s32.totalorder %s138, %s140
      %p144 = scmp.eq.s32.totalorder %s20, 0
      %p145 = por %p143, %p144
      %p146 = scmp.ne.s32.totalorder %s138, %s140
      %p147 = scmp.eq.s32.totalorder %s25, 1
      %p148 = por %p146, %p147
      %p149 = scmp.ne.s32.totalorder %s140, %s141
      %p150 = scmp.eq.s32.totalorder %s25, 0
      %p151 = por %p149, %p150
      %p152 = scmp.ne.s32.totalorder %s140, %s141
      %p153 = scmp.eq.s32.totalorder %s26, 1
      %p154 = por %p152, %p153
      %p156 = scmp.ne.s32.totalorder %s141, %s155
      %p157 = scmp.eq.s32.totalorder %s26, 0
      %p158 = por %p156, %p157
      %s160 = sadd.s32 %s159, 1
      %p163 = scmp.eq.s32.totalorder %s20, 1
      %p164 = scmp.ne.s32.totalorder %s159, %s161
      %p165 = scmp.eq.s32.totalorder %s20, 0
      %p166 = por %p164, %p165
      %p167 = scmp.ne.s32.totalorder %s159, %s161
      %p168 = scmp.eq.s32.totalorder %s25, 1
      %p169 = por %p167, %p168
      %p170 = scmp.ne.s32.totalorder %s161, %s162
      %p171 = scmp.eq.s32.totalorder %s25, 0
      %p172 = por %p170, %p171
      %p173 = scmp.ne.s32.totalorder %s161, %s162
      %p174 = scmp.eq.s32.totalorder %s26, 1
      %p175 = por %p173, %p174
      %p177 = scmp.ne.s32.totalorder %s162, %s176
      %p178 = scmp.eq.s32.totalorder %s26, 0
      %p179 = por %p177, %p178
      %s181 = sadd.s32 %s180, 1
      %p184 = scmp.eq.s32.totalorder %s20, 1
      %p185 = scmp.ne.s32.totalorder %s180, %s182
      %p186 = scmp.eq.s32.totalorder %s20, 0
      %p187 = por %p185, %p186
      %p188 = scmp.ne.s32.totalorder %s180, %s182
      %p189 = scmp.eq.s32.totalorder %s25, 1
      %p190 = por %p188, %p189
      %p191 = scmp.ne.s32.totalorder %s182, %s183
      %p192 = scmp.eq.s32.totalorder %s25, 0
      %p193 = por %p191, %p192
      %p194 = scmp.ne.s32.totalorder %s182, %s183
      %p195 = scmp.eq.s32.totalorder %s26, 1
      %p196 = por %p194, %p195
      %p198 = scmp.ne.s32.totalorder %s183, %s197
      %p199 = scmp.eq.s32.totalorder %s26, 0
      %p200 = por %p198, %p199
      %s202 = sadd.s32 %s201, 1
      %p205 = scmp.eq.s32.totalorder %s20, 1
      %p206 = scmp.ne.s32.totalorder %s201, %s203
      %p207 = scmp.eq.s32.totalorder %s20, 0
      %p208 = por %p206, %p207
      %p209 = scmp.ne.s32.totalorder %s201, %s203
      %p210 = scmp.eq.s32.totalorder %s25, 1
      %p211 = por %p209, %p210
      %p212 = scmp.ne.s32.totalorder %s203, %s204
      %p213 = scmp.eq.s32.totalorder %s25, 0
      %p214 = por %p212, %p213
      %p215 = scmp.ne.s32.totalorder %s203, %s204
      %p216 = scmp.eq.s32.totalorder %s26, 1
      %p217 = por %p215, %p216
      %p219 = scmp.ne.s32.totalorder %s204, %s218
      %p220 = scmp.eq.s32.totalorder %s26, 0
      %p221 = por %p219, %p220
      %s222 = ssub.s32 %s20, %s27
      %p223 = scmp.eq.s32.totalorder %s222, 0
      %s225 = sadd.s32 %s224, 1
      %s226 = scalar_select %p223, %s224, %s225
      %p229 = pneg %p223
      %p230 = scmp.eq.s32.totalorder %s20, 1
      %p231 = por %p229, %p230
      %p232 = scmp.ne.s32.totalorder %s224, %s227
      %p233 = scmp.eq.s32.totalorder %s20, 0
      %p234 = por %p232, %p233
      %p235 = scmp.ne.s32.totalorder %s224, %s227
      %p236 = scmp.eq.s32.totalorder %s25, 1
      %p237 = por %p235, %p236
      %p238 = scmp.ne.s32.totalorder %s227, %s228
      %p239 = scmp.eq.s32.totalorder %s25, 0
      %p240 = por %p238, %p239
      %p241 = scmp.ne.s32.totalorder %s227, %s228
      %p242 = scmp.eq.s32.totalorder %s26, 1
      %p243 = por %p241, %p242
      %p245 = scmp.ne.s32.totalorder %s228, %s244
      %p246 = scmp.eq.s32.totalorder %s26, 0
      %p247 = por %p245, %p246
      %p248 = scmp.le.s32.totalorder 1, %s20
      %p249 = scmp.lt.s32.totalorder %s20, 3
      %p250 = pnand %p248, %p249
      %p251 = pneg %p250
      // Predicated region
      $region9: #{tpu_custom_call.1} parent=5 // pred_check
        _
      $region10: #{tpu_custom_call.1} parent=5 // pred_check_branch
        %253 = sbr.rel (%p250) target = $region12
      $region11: #{tpu_custom_call.1} parent=5 // pred_region
        %s254 = ssub.s32 %s20, 1
        // Predicated region
        $region13: #{tpu_custom_call.1} parent=11 // pred_check
          %p255 = pneg %p67
        $region14: #{tpu_custom_call.1} parent=11 // pred_check_branch
          %257 = sbr.rel (%p255) target = $region16
        $region15: #{tpu_custom_call.1} parent=11 // pred_region
          %s259 = ssub.s32 256, 256
          %260 = vsyncadd [#allocation5], %s259
          %s261 = sshll.u32 [#allocation4], 4
          %s262 = int_to_ptr.vmem [resolvable:$true] %s261
          %267 = dma.hbm_to_vmem [thread:$0]  %s1, 256, %s262, [#allocation5], 64, 64, 4
        $region16: #{tpu_custom_call.1} parent=11 // pred_fallthru
          _
        // Predicated region
        $region17: #{tpu_custom_call.1} parent=11 // pred_check
          %p268 = pneg %p88
        $region18: #{tpu_custom_call.1} parent=11 // pred_check_branch
          %270 = sbr.rel (%p268) target = $region20
        $region19: #{tpu_custom_call.1} parent=11 // pred_region
          _
        $region20: #{tpu_custom_call.1} parent=11 // pred_fallthru
          _
        // Predicated region
        $region21: #{tpu_custom_call.1} parent=11 // pred_check
          %p271 = pneg %p109
        $region22: #{tpu_custom_call.1} parent=11 // pred_check_branch
          %273 = sbr.rel (%p271) target = $region24
        $region23: #{tpu_custom_call.1} parent=11 // pred_region
          _
        $region24: #{tpu_custom_call.1} parent=11 // pred_fallthru
          _
        // Predicated region
        $region25: #{tpu_custom_call.1} parent=11 // pred_check
          %p274 = pneg %p130
        $region26: #{tpu_custom_call.1} parent=11 // pred_check_branch
          %276 = sbr.rel (%p274) target = $region28
        $region27: #{tpu_custom_call.1} parent=11 // pred_region
          _
        $region28: #{tpu_custom_call.1} parent=11 // pred_fallthru
          _
        // Predicated region
        $region29: #{tpu_custom_call.1} parent=11 // pred_check
          %p277 = pneg %p151
        $region30: #{tpu_custom_call.1} parent=11 // pred_check_branch
          %279 = sbr.rel (%p277) target = $region32
        $region31: #{tpu_custom_call.1} parent=11 // pred_region
          %s281 = ssub.s32 256, 256
          %282 = vsyncadd [#allocation8], %s281
          %s283 = sshll.u32 [#allocation7], 4
          %s284 = int_to_ptr.vmem [resolvable:$true] %s283
          %289 = dma.hbm_to_vmem [thread:$0]  %s5, 256, %s284, [#allocation8], 64, 64, 4
        $region32: #{tpu_custom_call.1} parent=11 // pred_fallthru
          _
        // Predicated region
        $region33: #{tpu_custom_call.1} parent=11 // pred_check
          %p290 = pneg %p172
        $region34: #{tpu_custom_call.1} parent=11 // pred_check_branch
          %292 = sbr.rel (%p290) target = $region36
        $region35: #{tpu_custom_call.1} parent=11 // pred_region
          _
        $region36: #{tpu_custom_call.1} parent=11 // pred_fallthru
          _
        // Predicated region
        $region37: #{tpu_custom_call.1} parent=11 // pred_check
          %p293 = pneg %p193
        $region38: #{tpu_custom_call.1} parent=11 // pred_check_branch
          %295 = sbr.rel (%p293) target = $region40
        $region39: #{tpu_custom_call.1} parent=11 // pred_region
          _
        $region40: #{tpu_custom_call.1} parent=11 // pred_fallthru
          _
        // Predicated region
        $region41: #{tpu_custom_call.1} parent=11 // pred_check
          %p296 = pneg %p214
        $region42: #{tpu_custom_call.1} parent=11 // pred_check_branch
          %298 = sbr.rel (%p296) target = $region44
        $region43: #{tpu_custom_call.1} parent=11 // pred_region
          _
        $region44: #{tpu_custom_call.1} parent=11 // pred_fallthru
          _
      $region12: #{tpu_custom_call.1} parent=5 // pred_fallthru
        _
      %p299 = scmp.lt.s32.totalorder %s20, 2
      // Predicated region
      $region45: #{tpu_custom_call.1} parent=5 // pred_check
        %p300 = pneg %p299
      $region46: #{tpu_custom_call.1} parent=5 // pred_check_branch
        %302 = sbr.rel (%p300) target = $region48
      $region47: #{tpu_custom_call.1} parent=5 // pred_region
        // Predicated region
        $region49: #{tpu_custom_call.1} parent=47 // pred_check
          %p303 = pneg %p40
        $region50: #{tpu_custom_call.1} parent=47 // pred_check_branch
          %305 = sbr.rel (%p303) target = $region52
        $region51: #{tpu_custom_call.1} parent=47 // pred_region
          %p306 = scmp.lt.s32.totalorder %s20, 1
          %s307 = scalar_select %p306, %s20, 1
          %s308 = smul.addr %s307, 8
          %s309 = scalar_lea.vmem %s0, %s308
        $region52: #{tpu_custom_call.1} parent=47 // pred_fallthru
          _
      $region48: #{tpu_custom_call.1} parent=5 // pred_fallthru
        _
      %p310 = scmp.le.s32.totalorder 1, %s20
      %p311 = scmp.lt.s32.totalorder %s20, 3
      %p312 = pnand %p310, %p311
      %p313 = pneg %p312
      // Predicated region
      $region53: #{tpu_custom_call.1} parent=5 // pred_check
        _
      $region54: #{tpu_custom_call.1} parent=5 // pred_check_branch
        %315 = sbr.rel (%p312) target = $region56
      $region55: #{tpu_custom_call.1} parent=5 // pred_region
        %s316 = ssub.s32 %s20, 1
        // Predicated region
        $region57: #{tpu_custom_call.1} parent=55 // pred_check
          %p317 = pneg %p67
        $region58: #{tpu_custom_call.1} parent=55 // pred_check_branch
          %319 = sbr.rel (%p317) target = $region60
        $region59: #{tpu_custom_call.1} parent=55 // pred_region
          %320 = dma.done [#allocation5], 256
        $region60: #{tpu_custom_call.1} parent=55 // pred_fallthru
          _
        // Predicated region
        $region61: #{tpu_custom_call.1} parent=55 // pred_check
          %p321 = pneg %p151
        $region62: #{tpu_custom_call.1} parent=55 // pred_check_branch
          %323 = sbr.rel (%p321) target = $region64
        $region63: #{tpu_custom_call.1} parent=55 // pred_region
          %324 = dma.done [#allocation8], 256
        $region64: #{tpu_custom_call.1} parent=55 // pred_fallthru
          _
        %p325 = scmp.lt.s32.totalorder %s25, 1
        %s326 = scalar_select %p325, %s25, 1
        %s327 = smul.addr %s326, 8
        %s328 = scalar_lea.vmem %s0, %s327
        %p329 = pneg %p46
        %p330 = pneg %p43
        %p331 = pneg %p67
        %p332 = pneg %p64
        %p333 = pneg %p88
        %p334 = pneg %p85
        %p335 = pneg %p109
        %p336 = pneg %p106
        %p337 = pneg %p130
        %p338 = pneg %p127
        %p339 = pneg %p151
        %p340 = pneg %p148
        %p341 = pneg %p172
        %p342 = pneg %p169
        %p343 = pneg %p193
        %p344 = pneg %p190
        %p345 = pneg %p214
        %p346 = pneg %p211
        %p347 = pneg %p240
        %p348 = pneg %p237
        %s349 = sand.u32 %s227, 1
        %s350 = scalar_lea.sflag [#allocation6], %s349
        %s351 = sand.u32 %s227, 1
        %s352 = scalar_lea.vmem [#allocation9], %s351
        %p353 = scmp.lt.s32.totalorder %s25, 1
        %s354 = scalar_select %p353, %s25, 1
        %s355 = smul.addr %s354, 8
        %s356 = scalar_lea.vmem %s0, %s355
        %v358 = vld [vmem:[%s356] sm:$0xff]
        %v359 = vpack.c.bf16 %v358, %v358
        %v360 = vld [vmem:[#allocation4] sm:$0xf]
        %v361 = vld [vmem:[#allocation4 + $0x4] sm:$0xf]
        %v362 = vld [vmem:[#allocation4 + $0x8] sm:$0xf]
        %v363 = vld [vmem:[#allocation4 + $0xc] sm:$0xf]
        %v364 = vld [vmem:[%s2] sm:$0x1]
        %v366 = vlaneseq
        %v367 = vshrl.u32 %v366, 7
        %v368 = vsub.s32 0, %v367
        %v369 = vrot.slane %v364, %v368
        %v375 = vunpack.c.l.b16 %v360
        %v376 = vunpack.c.l.b16 %v361
        %v377 = vunpack.c.l.b16 %v362
        %v378 = vunpack.c.l.b16 %v363
        %v379 = vpack.c.b16 %v376, %v375
        %v380 = vpack.c.b16 %v378, %v377
        %vm383 = vcmask 261120
        %v385 = vsel %vm383, %v359, 0
        %387 = vmatprep.subr.bf16.mxu0 0
        %388 = vmatpush1.bf16.msra.mxu0 %v379
        %389 = vmatprep.subr.bf16.mxu0 0
        %390 = vmatpush1.bf16.msra.mxu0 %v380
        %391 = vmatprep.subr.bf16.mxu0 0
        %392 = vmatpush1.bf16.msra.mxu0 0
        %393 = vmatprep.subr.bf16.mxu0 0
        %394 = vmatpush1.bf16.msra.mxu0 0
        %395 = vmatprep.subr.bf16.mxu0 0
        %396 = vmatpush1.bf16.msra.mxu0 0
        %397 = vmatprep.subr.bf16.mxu0 0
        %398 = vmatpush1.bf16.msra.mxu0 0
        %399 = vmatprep.subr.bf16.mxu0 0
        %400 = vmatpush1.bf16.msra.mxu0 0
        %401 = vmatprep.subr.bf16.mxu0 0
        %402 = vmatpush1.bf16.msra.mxu0 0
        %403 = vmatprep.subr.bf16.mxu0 0
        %404 = vmatpush1.bf16.msra.mxu0 0
        %405 = vmatprep.subr.bf16.mxu0 0
        %406 = vmatpush1.bf16.msra.mxu0 0
        %407 = vmatprep.subr.bf16.mxu0 0
        %408 = vmatpush1.bf16.msra.mxu0 0
        %409 = vmatprep.subr.bf16.mxu0 0
        %410 = vmatpush1.bf16.msra.mxu0 0
        %411 = vmatprep.subr.bf16.mxu0 0
        %412 = vmatpush1.bf16.msra.mxu0 0
        %413 = vmatprep.subr.bf16.mxu0 0
        %414 = vmatpush1.bf16.msra.mxu0 0
        %415 = vmatprep.subr.bf16.mxu0 0
        %416 = vmatpush1.bf16.msra.mxu0 0
        %417 = vmatprep.subr.bf16.mxu0 0
        %418 = vmatpush1.bf16.msra.mxu0 0
        %419 = vmatprep.mubr.bf16.mxu0 0
        %420 = vmatmul.mubr.bf16.gmra.mrb[0].mxu0 %v385
        %v421 = vpop.f32.mrb[0].mxu0
        %v422 = vadd.f32 %v369, %v421
        %v423 = vpop.f32.mrb[0].mxu0
        %v424 = vpop.f32.mrb[0].mxu0
        %v425 = vpop.f32.mrb[0].mxu0
        %426 = vdwg.mxu0
        %v427 = vmax.f32 %v422, 0.0
        %v428 = vpack.c.bf16 %v427, %v427
        %v429 = vld [vmem:[%s3] sm:$0xf]
        %v430 = vld [vmem:[%s3 + $0x4] sm:$0xf]
        %v431 = vld [vmem:[%s3 + $0x8] sm:$0xf]
        %v432 = vld [vmem:[%s3 + $0xc] sm:$0xf]
        %v433 = vld [vmem:[%s4] sm:$0x1]
        %v435 = vlaneseq
        %v436 = vshrl.u32 %v435, 7
        %v437 = vsub.s32 0, %v436
        %v438 = vrot.slane %v433, %v437
        %v444 = vunpack.c.l.b16 %v429
        %v445 = vunpack.c.l.b16 %v430
        %v446 = vunpack.c.l.b16 %v431
        %v447 = vunpack.c.l.b16 %v432
        %v448 = vpack.c.b16 %v445, %v444
        %v449 = vpack.c.b16 %v447, %v446
        %v453 = vsel %vm383, %v428, 0
        %455 = vmatprep.subr.bf16.mxu0 0
        %456 = vmatpush1.bf16.msra.mxu0 %v448
        %457 = vmatprep.subr.bf16.mxu0 0
        %458 = vmatpush1.bf16.msra.mxu0 %v449
        %459 = vmatprep.subr.bf16.mxu0 0
        %460 = vmatpush1.bf16.msra.mxu0 0
        %461 = vmatprep.subr.bf16.mxu0 0
        %462 = vmatpush1.bf16.msra.mxu0 0
        %463 = vmatprep.subr.bf16.mxu0 0
        %464 = vmatpush1.bf16.msra.mxu0 0
        %465 = vmatprep.subr.bf16.mxu0 0
        %466 = vmatpush1.bf16.msra.mxu0 0
        %467 = vmatprep.subr.bf16.mxu0 0
        %468 = vmatpush1.bf16.msra.mxu0 0
        %469 = vmatprep.subr.bf16.mxu0 0
        %470 = vmatpush1.bf16.msra.mxu0 0
        %471 = vmatprep.subr.bf16.mxu0 0
        %472 = vmatpush1.bf16.msra.mxu0 0
        %473 = vmatprep.subr.bf16.mxu0 0
        %474 = vmatpush1.bf16.msra.mxu0 0
        %475 = vmatprep.subr.bf16.mxu0 0
        %476 = vmatpush1.bf16.msra.mxu0 0
        %477 = vmatprep.subr.bf16.mxu0 0
        %478 = vmatpush1.bf16.msra.mxu0 0
        %479 = vmatprep.subr.bf16.mxu0 0
        %480 = vmatpush1.bf16.msra.mxu0 0
        %481 = vmatprep.subr.bf16.mxu0 0
        %482 = vmatpush1.bf16.msra.mxu0 0
        %483 = vmatprep.subr.bf16.mxu0 0
        %484 = vmatpush1.bf16.msra.mxu0 0
        %485 = vmatprep.subr.bf16.mxu0 0
        %486 = vmatpush1.bf16.msra.mxu0 0
        %487 = vmatprep.mubr.bf16.mxu0 0
        %488 = vmatmul.mubr.bf16.gmra.mrb[0].mxu0 %v453
        %v489 = vpop.f32.mrb[0].mxu0
        %v490 = vadd.f32 %v438, %v489
        %v491 = vpop.f32.mrb[0].mxu0
        %v492 = vpop.f32.mrb[0].mxu0
        %v493 = vpop.f32.mrb[0].mxu0
        %494 = vdwg.mxu0
        %v495 = vmax.f32 %v490, 0.0
        %v496 = vpack.c.bf16 %v495, %v495
        %v497 = vld [vmem:[#allocation7] sm:$0xf]
        %v498 = vld [vmem:[#allocation7 + $0x4] sm:$0xf]
        %v499 = vld [vmem:[#allocation7 + $0x8] sm:$0xf]
        %v500 = vld [vmem:[#allocation7 + $0xc] sm:$0xf]
        %v505 = vunpack.c.l.b16 %v497
        %v506 = vunpack.c.l.b16 %v498
        %v507 = vunpack.c.l.b16 %v499
        %v508 = vunpack.c.l.b16 %v500
        %v509 = vpack.c.b16 %v506, %v505
        %v510 = vpack.c.b16 %v508, %v507
        %v514 = vsel %vm383, %v496, 0
        %516 = vmatprep.subr.bf16.mxu0 0
        %517 = vmatpush1.bf16.msra.mxu0 %v509
        %518 = vmatprep.subr.bf16.mxu0 0
        %519 = vmatpush1.bf16.msra.mxu0 %v510
        %520 = vmatprep.subr.bf16.mxu0 0
        %521 = vmatpush1.bf16.msra.mxu0 0
        %522 = vmatprep.subr.bf16.mxu0 0
        %523 = vmatpush1.bf16.msra.mxu0 0
        %524 = vmatprep.subr.bf16.mxu0 0
        %525 = vmatpush1.bf16.msra.mxu0 0
        %526 = vmatprep.subr.bf16.mxu0 0
        %527 = vmatpush1.bf16.msra.mxu0 0
        %528 = vmatprep.subr.bf16.mxu0 0
        %529 = vmatpush1.bf16.msra.mxu0 0
        %530 = vmatprep.subr.bf16.mxu0 0
        %531 = vmatpush1.bf16.msra.mxu0 0
        %532 = vmatprep.subr.bf16.mxu0 0
        %533 = vmatpush1.bf16.msra.mxu0 0
        %534 = vmatprep.subr.bf16.mxu0 0
        %535 = vmatpush1.bf16.msra.mxu0 0
        %536 = vmatprep.subr.bf16.mxu0 0
        %537 = vmatpush1.bf16.msra.mxu0 0
        %538 = vmatprep.subr.bf16.mxu0 0
        %539 = vmatpush1.bf16.msra.mxu0 0
        %540 = vmatprep.subr.bf16.mxu0 0
        %541 = vmatpush1.bf16.msra.mxu0 0
        %542 = vmatprep.subr.bf16.mxu0 0
        %543 = vmatpush1.bf16.msra.mxu0 0
        %544 = vmatprep.subr.bf16.mxu0 0
        %545 = vmatpush1.bf16.msra.mxu0 0
        %546 = vmatprep.subr.bf16.mxu0 0
        %547 = vmatpush1.bf16.msra.mxu0 0
        %548 = vmatprep.mubr.bf16.mxu0 0
        %549 = vmatmul.mubr.bf16.gmra.mrb[0].mxu0 %v514
        %v550 = vpop.f32.mrb[0].mxu0
        %v551 = vadd.f32 0.0, %v550
        %v552 = vpop.f32.mrb[0].mxu0
        %v553 = vpop.f32.mrb[0].mxu0
        %v554 = vpop.f32.mrb[0].mxu0
        %555 = vdwg.mxu0
        %vm556 = vcmask 785408
        %557 = vst.msk [vmem:[#allocation2] sm:$0xff] %vm556, %v551
        %v558 = vld [vmem:[#allocation2] sm:$0xff]
        %v559 = vpack.c.bf16 %v558, %v558
        %561 = vrot.lane.b32.xlu0 %v559, 96
        %v562 = vpop.permute.xlu0 %561
        %vm563 = vcmask 64512
        %v565 = vsel %vm563, %v559, 0
        %v568 = vsel %vm563, %v562, 0
        %570 = vmatprep.subr.bf16.mxu0 0
        %571 = vmatpush1.bf16.xpose.msra.mxu0 %v568
        %572 = vmatprep.subr.bf16.mxu0 0
        %573 = vmatpush1.bf16.xpose.msra.mxu0 0
        %574 = vmatprep.subr.bf16.mxu0 0
        %575 = vmatpush1.bf16.xpose.msra.mxu0 0
        %576 = vmatprep.subr.bf16.mxu0 0
        %577 = vmatpush1.bf16.xpose.msra.mxu0 0
        %578 = vmatprep.subr.bf16.mxu0 0
        %579 = vmatpush1.bf16.xpose.msra.mxu0 0
        %580 = vmatprep.subr.bf16.mxu0 0
        %581 = vmatpush1.bf16.xpose.msra.mxu0 0
        %582 = vmatprep.subr.bf16.mxu0 0
        %583 = vmatpush1.bf16.xpose.msra.mxu0 0
        %584 = vmatprep.subr.bf16.mxu0 0
        %585 = vmatpush1.bf16.xpose.msra.mxu0 0
        %586 = vmatprep.subr.bf16.mxu0 0
        %587 = vmatpush1.bf16.xpose.msra.mxu0 0
        %588 = vmatprep.subr.bf16.mxu0 0
        %589 = vmatpush1.bf16.xpose.msra.mxu0 0
        %590 = vmatprep.subr.bf16.mxu0 0
        %591 = vmatpush1.bf16.xpose.msra.mxu0 0
        %592 = vmatprep.subr.bf16.mxu0 0
        %593 = vmatpush1.bf16.xpose.msra.mxu0 0
        %594 = vmatprep.subr.bf16.mxu0 0
        %595 = vmatpush1.bf16.xpose.msra.mxu0 0
        %596 = vmatprep.subr.bf16.mxu0 0
        %597 = vmatpush1.bf16.xpose.msra.mxu0 0
        %598 = vmatprep.subr.bf16.mxu0 0
        %599 = vmatpush1.bf16.xpose.msra.mxu0 0
        %600 = vmatprep.subr.bf16.mxu0 0
        %601 = vmatpush1.bf16.xpose.msra.mxu0 0
        %602 = vmatprep.mubr.bf16.mxu0 0
        %603 = vmatmul.mubr.bf16.gmra.mrb[0].mxu0 %v565
        %v604 = vpop.f32.mrb[0].mxu0
        %v605 = vadd.f32 0.0, %v604
        %v606 = vpop.f32.mrb[0].mxu0
        %v607 = vpop.f32.mrb[0].mxu0
        %v608 = vpop.f32.mrb[0].mxu0
        %609 = vdwg.mxu0
        %v610 = vmul.f32 %v605, 0.35355338
        %v611 = vsel %vm563, %v610, -inf
        %612 = vmax.xlane.f32.xlu0 %v611
        %v613 = vpop.xlane.xlu0 %612
        %v614 = vsub.f32 %v610, %v613
        %v615 = vmul.f32 %v614, 1.442695
        %v616 = vpow.pop %v615
        %v617 = vsel %vm563, %v616, 0.0
        %618 = vadd.xlane.f32.xlu0 %v617
        %v619 = vpop.xlane.xlu0 %618
        %v620 = vrcp.pop %v619
        %v621 = vmul.f32 %v616, %v620
        %v622 = vpack.c.bf16 %v621, %v621
        %623 = vrot.lane.b32.xlu0 %v559, 64
        %v624 = vpop.permute.xlu0 %623
        %v626 = vsel %vm563, %v622, 0
        %vm628 = vcmask 1043456
        %v630 = vsel %vm628, %v624, 0
        %632 = vmatprep.subr.bf16.mxu0 0
        %633 = vmatpush1.bf16.msra.mxu0 %v630
        %634 = vmatprep.subr.bf16.mxu0 0
        %635 = vmatpush1.bf16.msra.mxu0 0
        %636 = vmatprep.subr.bf16.mxu0 0
        %637 = vmatpush1.bf16.msra.mxu0 0
        %638 = vmatprep.subr.bf16.mxu0 0
        %639 = vmatpush1.bf16.msra.mxu0 0
        %640 = vmatprep.subr.bf16.mxu0 0
        %641 = vmatpush1.bf16.msra.mxu0 0
        %642 = vmatprep.subr.bf16.mxu0 0
        %643 = vmatpush1.bf16.msra.mxu0 0
        %644 = vmatprep.subr.bf16.mxu0 0
        %645 = vmatpush1.bf16.msra.mxu0 0
        %646 = vmatprep.subr.bf16.mxu0 0
        %647 = vmatpush1.bf16.msra.mxu0 0
        %648 = vmatprep.subr.bf16.mxu0 0
        %649 = vmatpush1.bf16.msra.mxu0 0
        %650 = vmatprep.subr.bf16.mxu0 0
        %651 = vmatpush1.bf16.msra.mxu0 0
        %652 = vmatprep.subr.bf16.mxu0 0
        %653 = vmatpush1.bf16.msra.mxu0 0
        %654 = vmatprep.subr.bf16.mxu0 0
        %655 = vmatpush1.bf16.msra.mxu0 0
        %656 = vmatprep.subr.bf16.mxu0 0
        %657 = vmatpush1.bf16.msra.mxu0 0
        %658 = vmatprep.subr.bf16.mxu0 0
        %659 = vmatpush1.bf16.msra.mxu0 0
        %660 = vmatprep.subr.bf16.mxu0 0
        %661 = vmatpush1.bf16.msra.mxu0 0
        %662 = vmatprep.subr.bf16.mxu0 0
        %663 = vmatpush1.bf16.msra.mxu0 0
        %664 = vmatprep.mubr.bf16.mxu0 0
        %665 = vmatmul.mubr.bf16.gmra.mrb[0].mxu0 %v626
        %v666 = vpop.f32.mrb[0].mxu0
        %v667 = vadd.f32 0.0, %v666
        %v668 = vpop.f32.mrb[0].mxu0
        %v669 = vpop.f32.mrb[0].mxu0
        %v670 = vpop.f32.mrb[0].mxu0
        %671 = vdwg.mxu0
        %672 = vst.msk [vmem:[#allocation3] sm:$0xff] %vm563, %v667
        %v673 = vld [vmem:[#allocation2] sm:$0xff]
        %v674 = vpack.c.bf16 %v673, %v673
        %676 = vrot.lane.b32.xlu0 %v674, 120
        %v677 = vpop.permute.xlu0 %676
        %678 = vrot.lane.b32.xlu0 %v674, 88
        %v679 = vpop.permute.xlu0 %678
        %v681 = vsel %vm563, %v677, 0
        %v684 = vsel %vm563, %v679, 0
        %686 = vmatprep.subr.bf16.mxu0 0
        %687 = vmatpush1.bf16.xpose.msra.mxu0 %v684
        %688 = vmatprep.subr.bf16.mxu0 0
        %689 = vmatpush1.bf16.xpose.msra.mxu0 0
        %690 = vmatprep.subr.bf16.mxu0 0
        %691 = vmatpush1.bf16.xpose.msra.mxu0 0
        %692 = vmatprep.subr.bf16.mxu0 0
        %693 = vmatpush1.bf16.xpose.msra.mxu0 0
        %694 = vmatprep.subr.bf16.mxu0 0
        %695 = vmatpush1.bf16.xpose.msra.mxu0 0
        %696 = vmatprep.subr.bf16.mxu0 0
        %697 = vmatpush1.bf16.xpose.msra.mxu0 0
        %698 = vmatprep.subr.bf16.mxu0 0
        %699 = vmatpush1.bf16.xpose.msra.mxu0 0
        %700 = vmatprep.subr.bf16.mxu0 0
        %701 = vmatpush1.bf16.xpose.msra.mxu0 0
        %702 = vmatprep.subr.bf16.mxu0 0
        %703 = vmatpush1.bf16.xpose.msra.mxu0 0
        %704 = vmatprep.subr.bf16.mxu0 0
        %705 = vmatpush1.bf16.xpose.msra.mxu0 0
        %706 = vmatprep.subr.bf16.mxu0 0
        %707 = vmatpush1.bf16.xpose.msra.mxu0 0
        %708 = vmatprep.subr.bf16.mxu0 0
        %709 = vmatpush1.bf16.xpose.msra.mxu0 0
        %710 = vmatprep.subr.bf16.mxu0 0
        %711 = vmatpush1.bf16.xpose.msra.mxu0 0
        %712 = vmatprep.subr.bf16.mxu0 0
        %713 = vmatpush1.bf16.xpose.msra.mxu0 0
        %714 = vmatprep.subr.bf16.mxu0 0
        %715 = vmatpush1.bf16.xpose.msra.mxu0 0
        %716 = vmatprep.subr.bf16.mxu0 0
        %717 = vmatpush1.bf16.xpose.msra.mxu0 0
        %718 = vmatprep.mubr.bf16.mxu0 0
        %719 = vmatmul.mubr.bf16.gmra.mrb[0].mxu0 %v681
        %v720 = vpop.f32.mrb[0].mxu0
        %v721 = vadd.f32 0.0, %v720
        %v722 = vpop.f32.mrb[0].mxu0
        %v723 = vpop.f32.mrb[0].mxu0
        %v724 = vpop.f32.mrb[0].mxu0
        %725 = vdwg.mxu0
        %v726 = vmul.f32 %v721, 0.35355338
        %v727 = vsel %vm563, %v726, -inf
        %728 = vmax.xlane.f32.xlu0 %v727
        %v729 = vpop.xlane.xlu0 %728
        %v730 = vsub.f32 %v726, %v729
        %v731 = vmul.f32 %v730, 1.442695
        %v732 = vpow.pop %v731
        %v733 = vsel %vm563, %v732, 0.0
        %734 = vadd.xlane.f32.xlu0 %v733
        %v735 = vpop.xlane.xlu0 %734
        %v736 = vrcp.pop %v735
        %v737 = vmul.f32 %v732, %v736
        %v738 = vpack.c.bf16 %v737, %v737
        %739 = vrot.lane.b32.xlu0 %v674, 56
        %v740 = vpop.permute.xlu0 %739
        %v742 = vsel %vm563, %v738, 0
        %v745 = vsel %vm628, %v740, 0
        %747 = vmatprep.subr.bf16.mxu0 0
        %748 = vmatpush1.bf16.msra.mxu0 %v745
        %749 = vmatprep.subr.bf16.mxu0 0
        %750 = vmatpush1.bf16.msra.mxu0 0
        %751 = vmatprep.subr.bf16.mxu0 0
        %752 = vmatpush1.bf16.msra.mxu0 0
        %753 = vmatprep.subr.bf16.mxu0 0
        %754 = vmatpush1.bf16.msra.mxu0 0
        %755 = vmatprep.subr.bf16.mxu0 0
        %756 = vmatpush1.bf16.msra.mxu0 0
        %757 = vmatprep.subr.bf16.mxu0 0
        %758 = vmatpush1.bf16.msra.mxu0 0
        %759 = vmatprep.subr.bf16.mxu0 0
        %760 = vmatpush1.bf16.msra.mxu0 0
        %761 = vmatprep.subr.bf16.mxu0 0
        %762 = vmatpush1.bf16.msra.mxu0 0
        %763 = vmatprep.subr.bf16.mxu0 0
        %764 = vmatpush1.bf16.msra.mxu0 0
        %765 = vmatprep.subr.bf16.mxu0 0
        %766 = vmatpush1.bf16.msra.mxu0 0
        %767 = vmatprep.subr.bf16.mxu0 0
        %768 = vmatpush1.bf16.msra.mxu0 0
        %769 = vmatprep.subr.bf16.mxu0 0
        %770 = vmatpush1.bf16.msra.mxu0 0
        %771 = vmatprep.subr.bf16.mxu0 0
        %772 = vmatpush1.bf16.msra.mxu0 0
        %773 = vmatprep.subr.bf16.mxu0 0
        %774 = vmatpush1.bf16.msra.mxu0 0
        %775 = vmatprep.subr.bf16.mxu0 0
        %776 = vmatpush1.bf16.msra.mxu0 0
        %777 = vmatprep.subr.bf16.mxu0 0
        %778 = vmatpush1.bf16.msra.mxu0 0
        %779 = vmatprep.mubr.bf16.mxu0 0
        %780 = vmatmul.mubr.bf16.gmra.mrb[0].mxu0 %v742
        %v781 = vpop.f32.mrb[0].mxu0
        %v782 = vadd.f32 0.0, %v781
        %v783 = vpop.f32.mrb[0].mxu0
        %v784 = vpop.f32.mrb[0].mxu0
        %v785 = vpop.f32.mrb[0].mxu0
        %786 = vdwg.mxu0
        %788 = vrot.lane.b32.xlu0 %v782, 8
        %v789 = vpop.permute.xlu0 %788
        %vm791 = vcmask 130112
        %792 = vst.msk [vmem:[#allocation3] sm:$0xff] %vm791, %v789
        %v793 = vld [vmem:[#allocation2] sm:$0xff]
        %v794 = vpack.c.bf16 %v793, %v793
        %796 = vrot.lane.b32.xlu0 %v794, 112
        %v797 = vpop.permute.xlu0 %796
        %798 = vrot.lane.b32.xlu0 %v794, 80
        %v799 = vpop.permute.xlu0 %798
        %v801 = vsel %vm563, %v797, 0
        %v804 = vsel %vm563, %v799, 0
        %806 = vmatprep.subr.bf16.mxu0 0
        %807 = vmatpush1.bf16.xpose.msra.mxu0 %v804
        %808 = vmatprep.subr.bf16.mxu0 0
        %809 = vmatpush1.bf16.xpose.msra.mxu0 0
        %810 = vmatprep.subr.bf16.mxu0 0
        %811 = vmatpush1.bf16.xpose.msra.mxu0 0
        %812 = vmatprep.subr.bf16.mxu0 0
        %813 = vmatpush1.bf16.xpose.msra.mxu0 0
        %814 = vmatprep.subr.bf16.mxu0 0
        %815 = vmatpush1.bf16.xpose.msra.mxu0 0
        %816 = vmatprep.subr.bf16.mxu0 0
        %817 = vmatpush1.bf16.xpose.msra.mxu0 0
        %818 = vmatprep.subr.bf16.mxu0 0
        %819 = vmatpush1.bf16.xpose.msra.mxu0 0
        %820 = vmatprep.subr.bf16.mxu0 0
        %821 = vmatpush1.bf16.xpose.msra.mxu0 0
        %822 = vmatprep.subr.bf16.mxu0 0
        %823 = vmatpush1.bf16.xpose.msra.mxu0 0
        %824 = vmatprep.subr.bf16.mxu0 0
        %825 = vmatpush1.bf16.xpose.msra.mxu0 0
        %826 = vmatprep.subr.bf16.mxu0 0
        %827 = vmatpush1.bf16.xpose.msra.mxu0 0
        %828 = vmatprep.subr.bf16.mxu0 0
        %829 = vmatpush1.bf16.xpose.msra.mxu0 0
        %830 = vmatprep.subr.bf16.mxu0 0
        %831 = vmatpush1.bf16.xpose.msra.mxu0 0
        %832 = vmatprep.subr.bf16.mxu0 0
        %833 = vmatpush1.bf16.xpose.msra.mxu0 0
        %834 = vmatprep.subr.bf16.mxu0 0
        %835 = vmatpush1.bf16.xpose.msra.mxu0 0
        %836 = vmatprep.subr.bf16.mxu0 0
        %837 = vmatpush1.bf16.xpose.msra.mxu0 0
        %838 = vmatprep.mubr.bf16.mxu0 0
        %839 = vmatmul.mubr.bf16.gmra.mrb[0].mxu0 %v801
        %v840 = vpop.f32.mrb[0].mxu0
        %v841 = vadd.f32 0.0, %v840
        %v842 = vpop.f32.mrb[0].mxu0
        %v843 = vpop.f32.mrb[0].mxu0
        %v844 = vpop.f32.mrb[0].mxu0
        %845 = vdwg.mxu0
        %v846 = vmul.f32 %v841, 0.35355338
        %v847 = vsel %vm563, %v846, -inf
        %848 = vmax.xlane.f32.xlu0 %v847
        %v849 = vpop.xlane.xlu0 %848
        %v850 = vsub.f32 %v846, %v849
        %v851 = vmul.f32 %v850, 1.442695
        %v852 = vpow.pop %v851
        %v853 = vsel %vm563, %v852, 0.0
        %854 = vadd.xlane.f32.xlu0 %v853
        %v855 = vpop.xlane.xlu0 %854
        %v856 = vrcp.pop %v855
        %v857 = vmul.f32 %v852, %v856
        %v858 = vpack.c.bf16 %v857, %v857
        %859 = vrot.lane.b32.xlu0 %v794, 48
        %v860 = vpop.permute.xlu0 %859
        %v862 = vsel %vm563, %v858, 0
        %v865 = vsel %vm628, %v860, 0
        %867 = vmatprep.subr.bf16.mxu0 0
        %868 = vmatpush1.bf16.msra.mxu0 %v865
        %869 = vmatprep.subr.bf16.mxu0 0
        %870 = vmatpush1.bf16.msra.mxu0 0
        %871 = vmatprep.subr.bf16.mxu0 0
        %872 = vmatpush1.bf16.msra.mxu0 0
        %873 = vmatprep.subr.bf16.mxu0 0
        %874 = vmatpush1.bf16.msra.mxu0 0
        %875 = vmatprep.subr.bf16.mxu0 0
        %876 = vmatpush1.bf16.msra.mxu0 0
        %877 = vmatprep.subr.bf16.mxu0 0
        %878 = vmatpush1.bf16.msra.mxu0 0
        %879 = vmatprep.subr.bf16.mxu0 0
        %880 = vmatpush1.bf16.msra.mxu0 0
        %881 = vmatprep.subr.bf16.mxu0 0
        %882 = vmatpush1.bf16.msra.mxu0 0
        %883 = vmatprep.subr.bf16.mxu0 0
        %884 = vmatpush1.bf16.msra.mxu0 0
        %885 = vmatprep.subr.bf16.mxu0 0
        %886 = vmatpush1.bf16.msra.mxu0 0
        %887 = vmatprep.subr.bf16.mxu0 0
        %888 = vmatpush1.bf16.msra.mxu0 0
        %889 = vmatprep.subr.bf16.mxu0 0
        %890 = vmatpush1.bf16.msra.mxu0 0
        %891 = vmatprep.subr.bf16.mxu0 0
        %892 = vmatpush1.bf16.msra.mxu0 0
        %893 = vmatprep.subr.bf16.mxu0 0
        %894 = vmatpush1.bf16.msra.mxu0 0
        %895 = vmatprep.subr.bf16.mxu0 0
        %896 = vmatpush1.bf16.msra.mxu0 0
        %897 = vmatprep.subr.bf16.mxu0 0
        %898 = vmatpush1.bf16.msra.mxu0 0
        %899 = vmatprep.mubr.bf16.mxu0 0
        %900 = vmatmul.mubr.bf16.gmra.mrb[0].mxu0 %v862
        %v901 = vpop.f32.mrb[0].mxu0
        %v902 = vadd.f32 0.0, %v901
        %v903 = vpop.f32.mrb[0].mxu0
        %v904 = vpop.f32.mrb[0].mxu0
        %v905 = vpop.f32.mrb[0].mxu0
        %906 = vdwg.mxu0
        %908 = vrot.lane.b32.xlu0 %v902, 16
        %v909 = vpop.permute.xlu0 %908
        %vm911 = vcmask 195712
        %912 = vst.msk [vmem:[#allocation3] sm:$0xff] %vm911, %v909
        %v913 = vld [vmem:[#allocation2] sm:$0xff]
        %v914 = vpack.c.bf16 %v913, %v913
        %916 = vrot.lane.b32.xlu0 %v914, 104
        %v917 = vpop.permute.xlu0 %916
        %918 = vrot.lane.b32.xlu0 %v914, 72
        %v919 = vpop.permute.xlu0 %918
        %v921 = vsel %vm563, %v917, 0
        %v924 = vsel %vm563, %v919, 0
        %926 = vmatprep.subr.bf16.mxu0 0
        %927 = vmatpush1.bf16.xpose.msra.mxu0 %v924
        %928 = vmatprep.subr.bf16.mxu0 0
        %929 = vmatpush1.bf16.xpose.msra.mxu0 0
        %930 = vmatprep.subr.bf16.mxu0 0
        %931 = vmatpush1.bf16.xpose.msra.mxu0 0
        %932 = vmatprep.subr.bf16.mxu0 0
        %933 = vmatpush1.bf16.xpose.msra.mxu0 0
        %934 = vmatprep.subr.bf16.mxu0 0
        %935 = vmatpush1.bf16.xpose.msra.mxu0 0
        %936 = vmatprep.subr.bf16.mxu0 0
        %937 = vmatpush1.bf16.xpose.msra.mxu0 0
        %938 = vmatprep.subr.bf16.mxu0 0
        %939 = vmatpush1.bf16.xpose.msra.mxu0 0
        %940 = vmatprep.subr.bf16.mxu0 0
        %941 = vmatpush1.bf16.xpose.msra.mxu0 0
        %942 = vmatprep.subr.bf16.mxu0 0
        %943 = vmatpush1.bf16.xpose.msra.mxu0 0
        %944 = vmatprep.subr.bf16.mxu0 0
        %945 = vmatpush1.bf16.xpose.msra.mxu0 0
        %946 = vmatprep.subr.bf16.mxu0 0
        %947 = vmatpush1.bf16.xpose.msra.mxu0 0
        %948 = vmatprep.subr.bf16.mxu0 0
        %949 = vmatpush1.bf16.xpose.msra.mxu0 0
        %950 = vmatprep.subr.bf16.mxu0 0
        %951 = vmatpush1.bf16.xpose.msra.mxu0 0
        %952 = vmatprep.subr.bf16.mxu0 0
        %953 = vmatpush1.bf16.xpose.msra.mxu0 0
        %954 = vmatprep.subr.bf16.mxu0 0
        %955 = vmatpush1.bf16.xpose.msra.mxu0 0
        %956 = vmatprep.subr.bf16.mxu0 0
        %957 = vmatpush1.bf16.xpose.msra.mxu0 0
        %958 = vmatprep.mubr.bf16.mxu0 0
        %959 = vmatmul.mubr.bf16.gmra.mrb[0].mxu0 %v921
        %v960 = vpop.f32.mrb[0].mxu0
        %v961 = vadd.f32 0.0, %v960
        %v962 = vpop.f32.mrb[0].mxu0
        %v963 = vpop.f32.mrb[0].mxu0
        %v964 = vpop.f32.mrb[0].mxu0
        %965 = vdwg.mxu0
        %v966 = vmul.f32 %v961, 0.35355338
        %v967 = vsel %vm563, %v966, -inf
        %968 = vmax.xlane.f32.xlu0 %v967
        %v969 = vpop.xlane.xlu0 %968
        %v970 = vsub.f32 %v966, %v969
        %v971 = vmul.f32 %v970, 1.442695
        %v972 = vpow.pop %v971
        %v973 = vsel %vm563, %v972, 0.0
        %974 = vadd.xlane.f32.xlu0 %v973
        %v975 = vpop.xlane.xlu0 %974
        %v976 = vrcp.pop %v975
        %v977 = vmul.f32 %v972, %v976
        %v978 = vpack.c.bf16 %v977, %v977
        %979 = vrot.lane.b32.xlu0 %v914, 40
        %v980 = vpop.permute.xlu0 %979
        %v982 = vsel %vm563, %v978, 0
        %v985 = vsel %vm628, %v980, 0
        %987 = vmatprep.subr.bf16.mxu0 0
        %988 = vmatpush1.bf16.msra.mxu0 %v985
        %989 = vmatprep.subr.bf16.mxu0 0
        %990 = vmatpush1.bf16.msra.mxu0 0
        %991 = vmatprep.subr.bf16.mxu0 0
        %992 = vmatpush1.bf16.msra.mxu0 0
        %993 = vmatprep.subr.bf16.mxu0 0
        %994 = vmatpush1.bf16.msra.mxu0 0
        %995 = vmatprep.subr.bf16.mxu0 0
        %996 = vmatpush1.bf16.msra.mxu0 0
        %997 = vmatprep.subr.bf16.mxu0 0
        %998 = vmatpush1.bf16.msra.mxu0 0
        %999 = vmatprep.subr.bf16.mxu0 0
        %1000 = vmatpush1.bf16.msra.mxu0 0
        %1001 = vmatprep.subr.bf16.mxu0 0
        %1002 = vmatpush1.bf16.msra.mxu0 0
        %1003 = vmatprep.subr.bf16.mxu0 0
        %1004 = vmatpush1.bf16.msra.mxu0 0
        %1005 = vmatprep.subr.bf16.mxu0 0
        %1006 = vmatpush1.bf16.msra.mxu0 0
        %1007 = vmatprep.subr.bf16.mxu0 0
        %1008 = vmatpush1.bf16.msra.mxu0 0
        %1009 = vmatprep.subr.bf16.mxu0 0
        %1010 = vmatpush1.bf16.msra.mxu0 0
        %1011 = vmatprep.subr.bf16.mxu0 0
        %1012 = vmatpush1.bf16.msra.mxu0 0
        %1013 = vmatprep.subr.bf16.mxu0 0
        %1014 = vmatpush1.bf16.msra.mxu0 0
        %1015 = vmatprep.subr.bf16.mxu0 0
        %1016 = vmatpush1.bf16.msra.mxu0 0
        %1017 = vmatprep.subr.bf16.mxu0 0
        %1018 = vmatpush1.bf16.msra.mxu0 0
        %1019 = vmatprep.mubr.bf16.mxu0 0
        %1020 = vmatmul.mubr.bf16.gmra.mrb[0].mxu0 %v982
        %v1021 = vpop.f32.mrb[0].mxu0
        %v1022 = vadd.f32 0.0, %v1021
        %v1023 = vpop.f32.mrb[0].mxu0
        %v1024 = vpop.f32.mrb[0].mxu0
        %v1025 = vpop.f32.mrb[0].mxu0
        %1026 = vdwg.mxu0
        %1028 = vrot.lane.b32.xlu0 %v1022, 24
        %v1029 = vpop.permute.xlu0 %1028
        %vm1031 = vcmask 261312
        %1032 = vst.msk [vmem:[#allocation3] sm:$0xff] %vm1031, %v1029
        %v1033 = vld [vmem:[%s6] sm:$0xf]
        %v1034 = vld [vmem:[%s6 + $0x4] sm:$0xf]
        %v1035 = vld [vmem:[%s6 + $0x8] sm:$0xf]
        %v1036 = vld [vmem:[%s6 + $0xc] sm:$0xf]
        %v1037 = vld [vmem:[%s7] sm:$0x1]
        %v1038 = vld [vmem:[%s8] sm:$0x1]
        %v1039 = vld [vmem:[#allocation3] sm:$0xff]
        %v1040 = vpack.c.bf16 %v1039, %v1039
        %v1042 = vlaneseq
        %v1043 = vshrl.u32 %v1042, 7
        %v1044 = vsub.s32 0, %v1043
        %v1045 = vrot.slane %v1037, %v1044
        %v1051 = vunpack.c.l.b16 %v1033
        %v1052 = vunpack.c.l.b16 %v1034
        %v1053 = vunpack.c.l.b16 %v1035
        %v1054 = vunpack.c.l.b16 %v1036
        %v1055 = vpack.c.b16 %v1052, %v1051
        %v1056 = vpack.c.b16 %v1054, %v1053
        %v1060 = vsel %vm383, %v1040, 0
        %1062 = vmatprep.subr.bf16.mxu0 0
        %1063 = vmatpush1.bf16.msra.mxu0 %v1055
        %1064 = vmatprep.subr.bf16.mxu0 0
        %1065 = vmatpush1.bf16.msra.mxu0 %v1056
        %1066 = vmatprep.subr.bf16.mxu0 0
        %1067 = vmatpush1.bf16.msra.mxu0 0
        %1068 = vmatprep.subr.bf16.mxu0 0
        %1069 = vmatpush1.bf16.msra.mxu0 0
        %1070 = vmatprep.subr.bf16.mxu0 0
        %1071 = vmatpush1.bf16.msra.mxu0 0
        %1072 = vmatprep.subr.bf16.mxu0 0
        %1073 = vmatpush1.bf16.msra.mxu0 0
        %1074 = vmatprep.subr.bf16.mxu0 0
        %1075 = vmatpush1.bf16.msra.mxu0 0
        %1076 = vmatprep.subr.bf16.mxu0 0
        %1077 = vmatpush1.bf16.msra.mxu0 0
        %1078 = vmatprep.subr.bf16.mxu0 0
        %1079 = vmatpush1.bf16.msra.mxu0 0
        %1080 = vmatprep.subr.bf16.mxu0 0
        %1081 = vmatpush1.bf16.msra.mxu0 0
        %1082 = vmatprep.subr.bf16.mxu0 0
        %1083 = vmatpush1.bf16.msra.mxu0 0
        %1084 = vmatprep.subr.bf16.mxu0 0
        %1085 = vmatpush1.bf16.msra.mxu0 0
        %1086 = vmatprep.subr.bf16.mxu0 0
        %1087 = vmatpush1.bf16.msra.mxu0 0
        %1088 = vmatprep.subr.bf16.mxu0 0
        %1089 = vmatpush1.bf16.msra.mxu0 0
        %1090 = vmatprep.subr.bf16.mxu0 0
        %1091 = vmatpush1.bf16.msra.mxu0 0
        %1092 = vmatprep.subr.bf16.mxu0 0
        %1093 = vmatpush1.bf16.msra.mxu0 0
        %1094 = vmatprep.mubr.bf16.mxu0 0
        %1095 = vmatmul.mubr.bf16.gmra.mrb[0].mxu0 %v1060
        %v1096 = vpop.f32.mrb[0].mxu0
        %v1097 = vadd.f32 %v1045, %v1096
        %v1098 = vpop.f32.mrb[0].mxu0
        %v1099 = vpop.f32.mrb[0].mxu0
        %v1100 = vpop.f32.mrb[0].mxu0
        %1101 = vdwg.mxu0
        %v1102 = vtanh.pop %v1097
        %v1104 = vlaneseq
        %v1105 = vshrl.u32 %v1104, 7
        %v1106 = vsub.s32 0, %v1105
        %v1107 = vrot.slane %v1038, %v1106
        %v1109 = vmul.f32 %v1102, %v1107
        %vm1110 = vcmask 130048
        %v1111 = vsel %vm1110, %v1109, 0.0
        %1112 = vadd.xlane.f32.xlu0 %v1111
        %v1113 = vpop.xlane.xlu0 %1112
        %v1114 = vrot.slane %v1113, 4
        %v1115 = vmax.f32 %v1113, %v1114
        %v1116 = vrot.slane %v1115, 2
        %v1117 = vmax.f32 %v1115, %v1116
        %v1118 = vrot.slane %v1117, 1
        %v1119 = vmax.f32 %v1117, %v1118
        %v1120 = vsub.f32 %v1113, %v1119
        %v1121 = vmul.f32 %v1120, 1.442695
        %v1122 = vpow.pop %v1121
        %v1123 = vrot.slane %v1122, 4
        %v1124 = vadd.f32 %v1122, %v1123
        %v1125 = vrot.slane %v1124, 2
        %v1126 = vadd.f32 %v1124, %v1125
        %v1127 = vrot.slane %v1126, 1
        %v1128 = vadd.f32 %v1126, %v1127
        %v1129 = vrcp.pop %v1128
        %v1130 = vmul.f32 %v1122, %v1129
        %v1131 = vmul.f32 %v1039, %v1130
        %v1132 = vsel %vm383, %v1131, 0.0
        %v1133 = vrot.slane %v1132, 4
        %v1134 = vadd.f32 %v1132, %v1133
        %v1135 = vrot.slane %v1134, 2
        %v1136 = vadd.f32 %v1134, %v1135
        %v1137 = vrot.slane %v1136, 1
        %v1138 = vadd.f32 %v1136, %v1137
        %vm1139 = vcmask 253952
        %1140 = vst.msk [vmem:[%s352] sm:$0x1] %vm1139, %v1138
        %s1141 = sand.u32 %s227, 1
        %s1142 = scalar_lea.sflag [#allocation6], %s1141
        %s1143 = sand.u32 %s227, 1
        %s1144 = scalar_lea.vmem [#allocation9], %s1143
        // Predicated region
        $region65: #{tpu_custom_call.1} parent=55 // pred_check
          %p1145 = pneg %p237
        $region66: #{tpu_custom_call.1} parent=55 // pred_check_branch
          %1147 = sbr.rel (%p1145) target = $region68
        $region67: #{tpu_custom_call.1} parent=55 // pred_region
          %s1149 = ssub.s32 16, 16
          %1150 = vsyncadd %s1142, %s1149
          %s1151 = smul.addr %s25, 16
          %s1152 = scalar_lea.hbm %s9, %s1151
          %s1154 = sshll.u32 %s1144, 4
          %s1155 = int_to_ptr.vmem [resolvable:$true] %s1154
          %1157 = dma.vmem_to_hbm [thread:$0]  %s1155, 16, %s1152, %s1142
        $region68: #{tpu_custom_call.1} parent=55 // pred_fallthru
          _
      $region56: #{tpu_custom_call.1} parent=5 // pred_fallthru
        _
      %p1158 = scmp.le.s32.totalorder 2, %s20
      // Predicated region
      $region69: #{tpu_custom_call.1} parent=5 // pred_check
        %p1159 = pneg %p1158
      $region70: #{tpu_custom_call.1} parent=5 // pred_check_branch
        %1161 = sbr.rel (%p1159) target = $region72
      $region71: #{tpu_custom_call.1} parent=5 // pred_region
        %s1162 = ssub.s32 %s20, 2
        // Predicated region
        $region73: #{tpu_custom_call.1} parent=71 // pred_check
          %p1163 = pneg %p243
        $region74: #{tpu_custom_call.1} parent=71 // pred_check_branch
          %1165 = sbr.rel (%p1163) target = $region76
        $region75: #{tpu_custom_call.1} parent=71 // pred_region
          %s1166 = sand.u32 %s228, 1
          %s1167 = scalar_lea.sflag [#allocation6], %s1166
          %s1168 = sand.u32 %s228, 1
          %s1169 = scalar_lea.vmem [#allocation9], %s1168
          %1170 = dma.done %s1167, 16
        $region76: #{tpu_custom_call.1} parent=71 // pred_fallthru
          _
      $region72: #{tpu_custom_call.1} parent=5 // pred_fallthru
        _
    $region6: #{tpu_custom_call.1} parent=1 // loop_footer
      %s24 = sadd.s32 1, %s20
    $region7: #{tpu_custom_call.1} parent=1 // loop_footer_branch
      %19 = sbr.rel target = $region3
    $region8: #{tpu_custom_call.1} parent=1 // loop_exit
      _
    %1171 = vsyncpa [#allocation5], 1
    %s1172 = scalar_lea.sflag [#allocation5], 1
    %1173 = vsyncpa %s1172, 1
    %1174 = vsyncpa [#allocation8], 1
    %1175 = vsyncpa [#allocation6], 1
    %s1176 = scalar_lea.sflag [#allocation6], 1
    %1177 = vsyncpa %s1176, 1

</llo_original>
